<compile_context>
chip_gen: v5e
topology: v5e:2x2
jax: 0.10.0
libtpu: 0.0.40
codegen_flags: <defaults>
</compile_context>

<pallas_src>
import math
from functools import partial

import jax
import jax.numpy as jnp
from jax.experimental import pallas as pl
from jax.experimental.pallas import tpu as pltpu

EPS = 1e-5  # PyTorch LayerNorm default eps


def _erf(x):
    # Abramowitz & Stegun 7.1.26 rational approximation (|err| < 1.5e-7);
    # approximates PyTorch's exact erf-based F.gelu to f32/bf16 tolerance.
    a1, a2, a3, a4, a5 = (0.254829592, -0.284496736, 1.421413741,
                          -1.453152027, 1.061405429)
    p = 0.3275911
    ax = jnp.abs(x)
    t = 1.0 / (1.0 + p * ax)
    poly = ((((a5 * t + a4) * t + a3) * t + a2) * t + a1) * t
    y = 1.0 - poly * jnp.exp(-ax * ax)
    return jnp.where(x >= 0, y, -y)


def _gelu_exact(x):
    return 0.5 * x * (1.0 + _erf(x * (1.0 / math.sqrt(2.0))))


def _layer_norm(x, g, b):
    mu = jnp.mean(x, axis=-1, keepdims=True)
    var = jnp.mean(jnp.square(x - mu), axis=-1, keepdims=True)
    return (x - mu) * jax.lax.rsqrt(var + EPS) * g + b


def _encoder_layer_kernel(*refs, nhead, compute_dtype, has_mask):
    if has_mask:
        (x_ref, maskp_ref, sel_ref, ht_ref, hmat_ref,
         wqkv_ref, bqkv_ref, wo_ref, bo_ref, g1_ref, be1_ref,
         w1_ref, b1_ref, w2_ref, b2_ref, g2_ref, be2_ref, o_ref) = refs
    else:
        (x_ref, sel_ref, ht_ref, hmat_ref,
         wqkv_ref, bqkv_ref, wo_ref, bo_ref, g1_ref, be1_ref,
         w1_ref, b1_ref, w2_ref, b2_ref, g2_ref, be2_ref, o_ref) = refs
        maskp_ref = None

    TB, S, E = x_ref.shape
    M = TB * S
    C = sel_ref.shape[0]                  # nhead * S packed "head x key" lanes
    cdt = compute_dtype

    # (TB, S, E) -> (M, E): merges leading dims only (lane dim untouched).
    x32 = x_ref[...].reshape(M, E).astype(jnp.float32)
    xc = x32.astype(cdt)                  # single low-precision copy for MXU

    # --- fused QKV projection: one (M, E) @ (E, 3E) MXU pass, f32 accumulate.
    # 1/sqrt(dh) is pre-folded into the Q columns by the wrapper.
    qkv = jnp.dot(xc, wqkv_ref[...],
                  preferred_element_type=jnp.float32) + bqkv_ref[...]
    q3 = qkv[:, :E].astype(cdt).reshape(TB, S, E)
    k3 = qkv[:, E:2 * E].reshape(TB, S, E)
    v3 = qkv[:, 2 * E:].reshape(TB, S, E)

    # --- all-head attention with no per-head loop / slices / lane concat.
    # Tile K/V along the packed "head*key" axis and zero off-head feature
    # columns with the block-diagonal selector: one batched matmul per batch
    # element then yields every head's scores lane-densely in (TB, S, C), and
    # a second one applies them to V, already in concatenated (head*dh) order.
    sel = sel_ref[...]                                                # (C, E)
    k_bd = (jnp.concatenate([k3] * nhead, axis=1) * sel).astype(cdt)  # (TB,C,E)
    v_bd = (jnp.concatenate([v3] * nhead, axis=1) * sel).astype(cdt)  # (TB,C,E)

    scores = jnp.einsum('bqe,bce->bqc', q3, k_bd,
                        preferred_element_type=jnp.float32)           # (TB,S,C)
    if maskp_ref is not None:
        scores = scores + maskp_ref[...]          # (S, C) additive, pre-tiled

    # Row-global max over all C lanes: softmax is shift-invariant per head, so
    # normalizing every head with the same (>= per-head-max) shift is exact;
    # it differs from per-head max only if the cross-head score spread exceeds
    # the exp underflow range (~88), and masked lanes (-inf) still exp to 0.
    scores = scores - jnp.max(scores, axis=-1, keepdims=True)
    p = jnp.exp(scores).reshape(M, C)

    # Per-head denominators via tiny matmuls against 0/1 head-membership maps
    # (keeps softmax math on full 128-lane vregs; no segmented reductions).
    denom = jnp.dot(p, ht_ref[...], preferred_element_type=jnp.float32)  # (M,nhead)
    r = pl.reciprocal(denom, approx=True)          # EUP slot
    r = r * (2.0 - denom * r)                      # 1 Newton step -> f32 exact
    r_full = jnp.dot(r, hmat_ref[...], preferred_element_type=jnp.float32)  # (M,C)
    p = (p * r_full).astype(cdt).reshape(TB, S, C)

    attn = jnp.einsum('bqc,bce->bqe', p, v_bd,
                      preferred_element_type=jnp.float32).reshape(M, E)
    attn = jnp.dot(attn.astype(cdt), wo_ref[...],
                   preferred_element_type=jnp.float32) + bo_ref[...]

    # dropout p=0.0 -> identity; post-norm (norm_first=False)
    y = _layer_norm(x32 + attn, g1_ref[...], be1_ref[...])

    # --- feed-forward block ---
    h1 = jnp.dot(y.astype(cdt), w1_ref[...],
                 preferred_element_type=jnp.float32) + b1_ref[...]
    h1 = _gelu_exact(h1)
    ff = jnp.dot(h1.astype(cdt), w2_ref[...],
                 preferred_element_type=jnp.float32) + b2_ref[...]

    z = _layer_norm(y + ff, g2_ref[...], be2_ref[...])
    o_ref[...] = z.reshape(TB, S, E).astype(o_ref.dtype)


def transformer_forward(x, params, mask=None, *, nhead=16, block_b=None,
                        compute_dtype=jnp.bfloat16):
    """Forward of Transformer (1 post-norm encoder layer). x: (B, S, E)."""
    B, S, E = x.shape
    dh = E // nhead
    C = nhead * S
    f32 = jnp.float32
    cdiv = lambda a, b: -(-a // b)

    # --- batch blocking: target M = TB*S >= 256 MXU rows, but keep >= 2
    # "parallel" grid steps when the batch allows (v7x has 2 TensorCores).
    if block_b is None:
        TB = max(1, min(B, cdiv(256, S)))
        if B > 1 and cdiv(B, TB) < 2:
            TB = cdiv(B, 2)
    else:
        TB = max(1, min(block_b, B))
    Bp = cdiv(B, TB) * TB
    xp = jnp.pad(x, ((0, Bp - B), (0, 0), (0, 0))) if Bp != B else x

    # --- mask: boolean converted like PyTorch (True -> -inf); pre-tiled to the
    # packed (S, nhead*S) score layout.  When mask is None a mask-free kernel
    # variant is compiled (no DMA, no in-kernel add).
    has_mask = mask is not None
    if has_mask:
        if mask.dtype == jnp.bool_:
            mask_f = jnp.where(mask, -jnp.inf, 0.0).astype(f32)
        else:
            mask_f = mask.astype(f32)
        mask_packed = jnp.tile(mask_f, (1, nhead))            # (S, C)

    # --- constant head-membership maps for the packed attention ---
    c_head = jnp.repeat(jnp.arange(nhead), S)     # head id of packed lane c
    e_head = jnp.repeat(jnp.arange(nhead), dh)    # head id of feature column e
    sel = (c_head[:, None] == e_head[None, :]).astype(f32)    # (C, E)
    ht = (c_head[:, None] == jnp.arange(nhead)[None, :]).astype(f32)  # (C, nhead)
    hmat = ht.T                                                # (nhead, C)

    # --- weights: PyTorch (out, in) -> (in, out); fold 1/sqrt(dh) into Q cols
    scale = 1.0 / math.sqrt(dh)
    col_scale = jnp.concatenate(
        [jnp.full((E,), scale, f32), jnp.ones((2 * E,), f32)])
    wqkv = (params["in_proj_weight"].astype(f32) * col_scale[:, None]).T
    bqkv = (params["in_proj_bias"].astype(f32) * col_scale).reshape(1, 3 * E)
    wo = params["out_proj_weight"].astype(f32).T
    bo = params["out_proj_bias"].astype(f32).reshape(1, E)
    w1 = params["linear1_weight"].astype(f32).T
    b1 = params["linear1_bias"].astype(f32).reshape(1, -1)
    w2 = params["linear2_weight"].astype(f32).T
    b2 = params["linear2_bias"].astype(f32).reshape(1, E)
    g1 = params["norm1_weight"].astype(f32).reshape(1, E)
    be1 = params["norm1_bias"].astype(f32).reshape(1, E)
    g2 = params["norm2_weight"].astype(f32).reshape(1, E)
    be2 = params["norm2_bias"].astype(f32).reshape(1, E)

    # bf16 (default) matmul inputs / f32 accumulate: native MXU rate and half
    # the weight DMA + VMEM; LayerNorm and softmax remain f32 in the kernel.
    wqkv, wo, w1, w2 = (w.astype(compute_dtype) for w in (wqkv, wo, w1, w2))

    dff = w1.shape[1]
    weights = (wqkv, bqkv, wo, bo, g1, be1, w1, b1, w2, b2, g2, be2)
    consts = (sel, ht, hmat)
    extra = ((mask_packed,) if has_mask else ()) + consts + weights

    def full_spec(a):
        return pl.BlockSpec(a.shape, lambda b, _nd=a.ndim: (0,) * _nd)

    in_specs = ([pl.BlockSpec((TB, S, E), lambda b: (b, 0, 0))]
                + [full_spec(a) for a in extra])

    # advisory cost hint for XLA scheduling around the custom call
    flops = Bp * S * (2 * E * 3 * E          # fused QKV
                      + 4 * C * E            # packed scores + p@v
                      + 4 * C * nhead        # denom + reciprocal broadcast
                      + 2 * E * E            # out_proj
                      + 4 * E * dff)         # FFN
    transcendentals = Bp * S * (C + dff)
    bytes_accessed = (2 * Bp * S * E * x.dtype.itemsize
                      + sum(int(a.size) * a.dtype.itemsize for a in extra))
    cost = pl.CostEstimate(flops=int(flops),
                           transcendentals=int(transcendentals),
                           bytes_accessed=int(bytes_accessed))

    kernel = partial(_encoder_layer_kernel, nhead=nhead,
                     compute_dtype=compute_dtype, has_mask=has_mask)
    out = pl.pallas_call(
        kernel,
        out_shape=jax.ShapeDtypeStruct((Bp, S, E), x.dtype),
        grid_spec=pltpu.PrefetchScalarGridSpec(
            num_scalar_prefetch=0,
            grid=(Bp // TB,),
            in_specs=in_specs,
            out_specs=pl.BlockSpec((TB, S, E), lambda b: (b, 0, 0)),
        ),
        compiler_params=pltpu.CompilerParams(
            dimension_semantics=("parallel",),
            # above v5e/v6e scoped defaults (16/32 MiB), below v7x's 64 MiB
            vmem_limit_bytes=48 * 1024 * 1024,
        ),
        cost_estimate=cost,
    )(xp, *extra)
    return out[:B] if Bp != B else out


def reference_forward(x, params, mask=None, *, nhead=16):
    """Pure-JAX reference mirroring nn.TransformerEncoderLayer semantics."""
    B, S, E = x.shape
    dh = E // nhead
    if mask is None:
        mask = jnp.zeros((S, S), jnp.float32)
    x32 = x.astype(jnp.float32)
    wq, wk, wv = jnp.split(params["in_proj_weight"], 3, axis=0)
    bq, bk, bv = jnp.split(params["in_proj_bias"], 3, axis=0)
    q = (x32 @ wq.T + bq).reshape(B, S, nhead, dh).transpose(0, 2, 1, 3)
    k = (x32 @ wk.T + bk).reshape(B, S, nhead, dh).transpose(0, 2, 1, 3)
    v = (x32 @ wv.T + bv).reshape(B, S, nhead, dh).transpose(0, 2, 1, 3)
    s = jnp.einsum("bhqd,bhkd->bhqk", q, k) / math.sqrt(dh) + mask
    p = jax.nn.softmax(s, axis=-1)
    a = jnp.einsum("bhqk,bhkd->bhqd", p, v).transpose(0, 2, 1, 3).reshape(B, S, E)
    a = a @ params["out_proj_weight"].T + params["out_proj_bias"]

    def ln(t, g, b):
        mu = t.mean(-1, keepdims=True)
        var = ((t - mu) ** 2).mean(-1, keepdims=True)
        return (t - mu) / jnp.sqrt(var + EPS) * g + b

    y = ln(x32 + a, params["norm1_weight"], params["norm1_bias"])
    h1 = jax.nn.gelu(y @ params["linear1_weight"].T + params["linear1_bias"],
                     approximate=False)
    ff = h1 @ params["linear2_weight"].T + params["linear2_bias"]
    z = ln(y + ff, params["norm2_weight"], params["norm2_bias"])
    return z.astype(x.dtype)


if __name__ == "__main__":
    # embed_dim=128, nhead=16 -> head_dim=8.  B=6 exercises the auto batch
    # block (TB=3 -> 2 parallel grid steps) and, with block_b=4, batch padding.
    B, S, E, NHEAD = 6, 8, 128, 16
    key = jax.random.PRNGKey(0)
    keys = jax.random.split(key, 10)
    init = lambda k, shape: (0.05 * jax.random.normal(k, shape)).astype(jnp.float32)

    params = {
        "in_proj_weight": init(keys[0], (3 * E, E)),
        "in_proj_bias":   init(keys[1], (3 * E,)),
        "out_proj_weight": init(keys[2], (E, E)),
        "out_proj_bias":   init(keys[3], (E,)),
        "linear1_weight": init(keys[4], (E, E)),   # dim_feedforward == embed_dim
        "linear1_bias":   init(keys[5], (E,)),
        "linear2_weight": init(keys[6], (E, E)),
        "linear2_bias":   init(keys[7], (E,)),
        "norm1_weight": jnp.ones((E,), jnp.float32),   # PyTorch LayerNorm defaults
        "norm1_bias":   jnp.zeros((E,), jnp.float32),
        "norm2_weight": jnp.ones((E,), jnp.float32),
        "norm2_bias":   jnp.zeros((E,), jnp.float32),
    }
    x = jax.random.normal(keys[8], (B, S, E), jnp.float32)

    ref = reference_forward(x, params, mask=None, nhead=NHEAD)

    # 1) default path: bf16 MXU inputs, auto batch block, no mask (loose tol)
    out_bf16 = jax.block_until_ready(transformer_forward(x, params, nhead=NHEAD))
    assert out_bf16.shape == (B, S, E), out_bf16.shape
    err_bf16 = float(jnp.max(jnp.abs(out_bf16 - ref)))
    assert jnp.allclose(out_bf16, ref, atol=5e-2, rtol=5e-2), err_bf16

    # 2) f32 path with explicit block_b=4 (exercises batch padding), tight tol
    out_f32 = jax.block_until_ready(
        transformer_forward(x, params, nhead=NHEAD, block_b=4,
                            compute_dtype=jnp.float32))
    err_f32 = float(jnp.max(jnp.abs(out_f32 - ref)))
    assert jnp.allclose(out_f32, ref, atol=2e-4, rtol=2e-4), err_f32

    # 3) boolean (causal) src_mask path, f32
    bool_mask = jnp.triu(jnp.ones((S, S), jnp.bool_), k=1)
    add_mask = jnp.where(bool_mask, -jnp.inf, 0.0).astype(jnp.float32)
    ref_m = reference_forward(x, params, mask=add_mask, nhead=NHEAD)
    out_m = jax.block_until_ready(
        transformer_forward(x, params, mask=bool_mask, nhead=NHEAD,
                            compute_dtype=jnp.float32))
    err_m = float(jnp.max(jnp.abs(out_m - ref_m)))
    assert jnp.allclose(out_m, ref_m, atol=2e-4, rtol=2e-4), err_m

    print("KERNEL_OK")
</pallas_src>

<mosaic_0001>
module attributes {stable_mosaic.version = 11 : i64} {
  func.func @_encoder_layer_kernel(%arg0: i32, %arg1: memref<3x8x128xf32, #tpu.memory_space<vmem>>, %arg2: memref<128x128xf32, #tpu.memory_space<vmem>>, %arg3: memref<128x16xf32, #tpu.memory_space<vmem>>, %arg4: memref<16x128xf32, #tpu.memory_space<vmem>>, %arg5: memref<128x384xbf16, #tpu.memory_space<vmem>>, %arg6: memref<1x384xf32, #tpu.memory_space<vmem>>, %arg7: memref<128x128xbf16, #tpu.memory_space<vmem>>, %arg8: memref<1x128xf32, #tpu.memory_space<vmem>>, %arg9: memref<1x128xf32, #tpu.memory_space<vmem>>, %arg10: memref<1x128xf32, #tpu.memory_space<vmem>>, %arg11: memref<128x128xbf16, #tpu.memory_space<vmem>>, %arg12: memref<1x128xf32, #tpu.memory_space<vmem>>, %arg13: memref<128x128xbf16, #tpu.memory_space<vmem>>, %arg14: memref<1x128xf32, #tpu.memory_space<vmem>>, %arg15: memref<1x128xf32, #tpu.memory_space<vmem>>, %arg16: memref<1x128xf32, #tpu.memory_space<vmem>>, %arg17: memref<3x8x128xf32, #tpu.memory_space<vmem>>) attributes {dimension_semantics = [#tpu.dimension_semantics<parallel>], iteration_bounds = array<i64: 2>, scalar_prefetch = 0 : i64, scratch_operands = 0 : i64, tpu.core_type = #tpu.core_type<tc>, window_params = [{transform_indices = @transform_0, window_bounds = array<i64: 3, 8, 128>}, {pipeline_mode = #tpu.pipeline_mode<synchronous>, transform_indices = @transform_1, window_bounds = array<i64: 128, 128>}, {pipeline_mode = #tpu.pipeline_mode<synchronous>, transform_indices = @transform_2, window_bounds = array<i64: 128, 16>}, {pipeline_mode = #tpu.pipeline_mode<synchronous>, transform_indices = @transform_3, window_bounds = array<i64: 16, 128>}, {pipeline_mode = #tpu.pipeline_mode<synchronous>, transform_indices = @transform_4, window_bounds = array<i64: 128, 384>}, {pipeline_mode = #tpu.pipeline_mode<synchronous>, transform_indices = @transform_5, window_bounds = array<i64: 1, 384>}, {pipeline_mode = #tpu.pipeline_mode<synchronous>, transform_indices = @transform_6, window_bounds = array<i64: 128, 128>}, {pipeline_mode = #tpu.pipeline_mode<synchronous>, transform_indices = @transform_7, window_bounds = array<i64: 1, 128>}, {pipeline_mode = #tpu.pipeline_mode<synchronous>, transform_indices = @transform_8, window_bounds = array<i64: 1, 128>}, {pipeline_mode = #tpu.pipeline_mode<synchronous>, transform_indices = @transform_9, window_bounds = array<i64: 1, 128>}, {pipeline_mode = #tpu.pipeline_mode<synchronous>, transform_indices = @transform_10, window_bounds = array<i64: 128, 128>}, {pipeline_mode = #tpu.pipeline_mode<synchronous>, transform_indices = @transform_11, window_bounds = array<i64: 1, 128>}, {pipeline_mode = #tpu.pipeline_mode<synchronous>, transform_indices = @transform_12, window_bounds = array<i64: 128, 128>}, {pipeline_mode = #tpu.pipeline_mode<synchronous>, transform_indices = @transform_13, window_bounds = array<i64: 1, 128>}, {pipeline_mode = #tpu.pipeline_mode<synchronous>, transform_indices = @transform_14, window_bounds = array<i64: 1, 128>}, {pipeline_mode = #tpu.pipeline_mode<synchronous>, transform_indices = @transform_15, window_bounds = array<i64: 1, 128>}, {transform_indices = @transform_16, window_bounds = array<i64: 3, 8, 128>}]} {
    %c0 = arith.constant 0 : index
    %c0_0 = arith.constant 0 : index
    %c0_1 = arith.constant 0 : index
    %0 = vector.load %arg1[%c0, %c0_0, %c0_1] : memref<3x8x128xf32, #tpu.memory_space<vmem>>, vector<3x8x128xf32>
    %1 = vector.shape_cast %0 : vector<3x8x128xf32> to vector<24x128xf32>
    %2 = arith.truncf %1 : vector<24x128xf32> to vector<24x128xbf16>
    %c0_2 = arith.constant 0 : index
    %c0_3 = arith.constant 0 : index
    %3 = vector.load %arg5[%c0_2, %c0_3] : memref<128x384xbf16, #tpu.memory_space<vmem>>, vector<128x384xbf16>
    %cst = arith.constant dense<0.000000e+00> : vector<24x384xf32>
    %4 = tpu.matmul %2, %3, %cst {dimension_numbers = #tpu.dot_dimension_numbers<[1], [0], [0], [1], [0, 0, 1, 1], [], []>} : vector<24x128xbf16>, vector<128x384xbf16>, vector<24x384xf32> -> vector<24x384xf32>
    %c0_4 = arith.constant 0 : index
    %c0_5 = arith.constant 0 : index
    %5 = vector.load %arg6[%c0_4, %c0_5] : memref<1x384xf32, #tpu.memory_space<vmem>>, vector<1x384xf32>
    %6 = vector.broadcast %5 : vector<1x384xf32> to vector<24x384xf32>
    %7 = arith.addf %4, %6 : vector<24x384xf32>
    %8 = vector.extract_strided_slice %7 {offsets = [0, 0], sizes = [24, 128], strides = [1, 1]} : vector<24x384xf32> to vector<24x128xf32>
    %9 = arith.truncf %8 : vector<24x128xf32> to vector<24x128xbf16>
    %10 = vector.shape_cast %9 : vector<24x128xbf16> to vector<3x8x128xbf16>
    %11 = vector.extract_strided_slice %7 {offsets = [0, 128], sizes = [24, 128], strides = [1, 1]} : vector<24x384xf32> to vector<24x128xf32>
    %12 = vector.shape_cast %11 : vector<24x128xf32> to vector<3x8x128xf32>
    %13 = vector.extract_strided_slice %7 {offsets = [0, 256], sizes = [24, 128], strides = [1, 1]} : vector<24x384xf32> to vector<24x128xf32>
    %14 = vector.shape_cast %13 : vector<24x128xf32> to vector<3x8x128xf32>
    %c0_6 = arith.constant 0 : index
    %c0_7 = arith.constant 0 : index
    %15 = vector.load %arg2[%c0_6, %c0_7] : memref<128x128xf32, #tpu.memory_space<vmem>>, vector<128x128xf32>
    %16 = tpu.concatenate %12, %12, %12, %12, %12, %12, %12, %12, %12, %12, %12, %12, %12, %12, %12, %12 in 1 : vector<3x8x128xf32>, vector<3x8x128xf32>, vector<3x8x128xf32>, vector<3x8x128xf32>, vector<3x8x128xf32>, vector<3x8x128xf32>, vector<3x8x128xf32>, vector<3x8x128xf32>, vector<3x8x128xf32>, vector<3x8x128xf32>, vector<3x8x128xf32>, vector<3x8x128xf32>, vector<3x8x128xf32>, vector<3x8x128xf32>, vector<3x8x128xf32>, vector<3x8x128xf32> -> vector<3x128x128xf32>
    %17 = vector.shape_cast %15 : vector<128x128xf32> to vector<1x128x128xf32>
    %18 = vector.broadcast %17 : vector<1x128x128xf32> to vector<3x128x128xf32>
    %19 = arith.mulf %16, %18 : vector<3x128x128xf32>
    %20 = arith.truncf %19 : vector<3x128x128xf32> to vector<3x128x128xbf16>
    %21 = tpu.concatenate %14, %14, %14, %14, %14, %14, %14, %14, %14, %14, %14, %14, %14, %14, %14, %14 in 1 : vector<3x8x128xf32>, vector<3x8x128xf32>, vector<3x8x128xf32>, vector<3x8x128xf32>, vector<3x8x128xf32>, vector<3x8x128xf32>, vector<3x8x128xf32>, vector<3x8x128xf32>, vector<3x8x128xf32>, vector<3x8x128xf32>, vector<3x8x128xf32>, vector<3x8x128xf32>, vector<3x8x128xf32>, vector<3x8x128xf32>, vector<3x8x128xf32>, vector<3x8x128xf32> -> vector<3x128x128xf32>
    %22 = vector.shape_cast %15 : vector<128x128xf32> to vector<1x128x128xf32>
    %23 = vector.broadcast %22 : vector<1x128x128xf32> to vector<3x128x128xf32>
    %24 = arith.mulf %21, %23 : vector<3x128x128xf32>
    %25 = arith.truncf %24 : vector<3x128x128xf32> to vector<3x128x128xbf16>
    "tpu.trace_start"() <{level = 10 : i32, message = "bqe,bce->bqc"}> : () -> ()
    %cst_8 = arith.constant dense<0.000000e+00> : vector<3x8x128xf32>
    %26 = tpu.matmul %10, %20, %cst_8 {dimension_numbers = #tpu.dot_dimension_numbers<[2], [2], [1], [1], [0, 0, 0, 1, 1, 1], [0], [0]>} : vector<3x8x128xbf16>, vector<3x128x128xbf16>, vector<3x8x128xf32> -> vector<3x8x128xf32>
    "tpu.trace_stop"() : () -> ()
    %cst_9 = arith.constant dense<0xFF800000> : vector<3x8xf32>
    %27 = vector.multi_reduction <maximumf>, %26, %cst_9 [2] : vector<3x8x128xf32> to vector<3x8xf32>
    %28 = vector.shape_cast %27 : vector<3x8xf32> to vector<3x8x1xf32>
    %29 = vector.broadcast %28 : vector<3x8x1xf32> to vector<3x8x128xf32>
    %30 = arith.subf %26, %29 : vector<3x8x128xf32>
    %31 = math.exp %30 : vector<3x8x128xf32>
    %32 = vector.shape_cast %31 : vector<3x8x128xf32> to vector<24x128xf32>
    %c0_10 = arith.constant 0 : index
    %c0_11 = arith.constant 0 : index
    %33 = vector.load %arg3[%c0_10, %c0_11] : memref<128x16xf32, #tpu.memory_space<vmem>>, vector<128x16xf32>
    %cst_12 = arith.constant dense<0.000000e+00> : vector<24x16xf32>
    %34 = tpu.matmul %32, %33, %cst_12 {dimension_numbers = #tpu.dot_dimension_numbers<[1], [0], [0], [1], [0, 0, 1, 1], [], []>} : vector<24x128xf32>, vector<128x16xf32>, vector<24x16xf32> -> vector<24x16xf32>
    %35 = tpu.reciprocal %34 {approx = true} : vector<24x16xf32> -> vector<24x16xf32>
    %36 = arith.mulf %34, %35 : vector<24x16xf32>
    %cst_13 = arith.constant 2.000000e+00 : f32
    %37 = vector.broadcast %cst_13 : f32 to vector<24x16xf32>
    %38 = arith.subf %37, %36 : vector<24x16xf32>
    %39 = arith.mulf %35, %38 : vector<24x16xf32>
    %c0_14 = arith.constant 0 : index
    %c0_15 = arith.constant 0 : index
    %40 = vector.load %arg4[%c0_14, %c0_15] : memref<16x128xf32, #tpu.memory_space<vmem>>, vector<16x128xf32>
    %cst_16 = arith.constant dense<0.000000e+00> : vector<24x128xf32>
    %41 = tpu.matmul %39, %40, %cst_16 {dimension_numbers = #tpu.dot_dimension_numbers<[1], [0], [0], [1], [0, 0, 1, 1], [], []>} : vector<24x16xf32>, vector<16x128xf32>, vector<24x128xf32> -> vector<24x128xf32>
    %42 = arith.mulf %32, %41 : vector<24x128xf32>
    %43 = arith.truncf %42 : vector<24x128xf32> to vector<24x128xbf16>
    %44 = vector.shape_cast %43 : vector<24x128xbf16> to vector<3x8x128xbf16>
    "tpu.trace_start"() <{level = 10 : i32, message = "bqc,bce->bqe"}> : () -> ()
    %cst_17 = arith.constant dense<0.000000e+00> : vector<3x8x128xf32>
    %45 = tpu.matmul %44, %25, %cst_17 {dimension_numbers = #tpu.dot_dimension_numbers<[2], [1], [1], [2], [0, 0, 0, 1, 1, 2], [0], [0]>} : vector<3x8x128xbf16>, vector<3x128x128xbf16>, vector<3x8x128xf32> -> vector<3x8x128xf32>
    "tpu.trace_stop"() : () -> ()
    %46 = vector.shape_cast %45 : vector<3x8x128xf32> to vector<24x128xf32>
    %47 = arith.truncf %46 : vector<24x128xf32> to vector<24x128xbf16>
    %c0_18 = arith.constant 0 : index
    %c0_19 = arith.constant 0 : index
    %48 = vector.load %arg7[%c0_18, %c0_19] : memref<128x128xbf16, #tpu.memory_space<vmem>>, vector<128x128xbf16>
    %cst_20 = arith.constant dense<0.000000e+00> : vector<24x128xf32>
    %49 = tpu.matmul %47, %48, %cst_20 {dimension_numbers = #tpu.dot_dimension_numbers<[1], [0], [0], [1], [0, 0, 1, 1], [], []>} : vector<24x128xbf16>, vector<128x128xbf16>, vector<24x128xf32> -> vector<24x128xf32>
    %c0_21 = arith.constant 0 : index
    %c0_22 = arith.constant 0 : index
    %50 = vector.load %arg8[%c0_21, %c0_22] : memref<1x128xf32, #tpu.memory_space<vmem>>, vector<1x128xf32>
    %51 = vector.broadcast %50 : vector<1x128xf32> to vector<24x128xf32>
    %52 = arith.addf %49, %51 : vector<24x128xf32>
    %53 = arith.addf %1, %52 : vector<24x128xf32>
    %c0_23 = arith.constant 0 : index
    %c0_24 = arith.constant 0 : index
    %54 = vector.load %arg9[%c0_23, %c0_24] : memref<1x128xf32, #tpu.memory_space<vmem>>, vector<1x128xf32>
    %c0_25 = arith.constant 0 : index
    %c0_26 = arith.constant 0 : index
    %55 = vector.load %arg10[%c0_25, %c0_26] : memref<1x128xf32, #tpu.memory_space<vmem>>, vector<1x128xf32>
    %cst_27 = arith.constant dense<0.000000e+00> : vector<24xf32>
    %56 = vector.multi_reduction <add>, %53, %cst_27 [1] : vector<24x128xf32> to vector<24xf32>
    %57 = vector.shape_cast %56 : vector<24xf32> to vector<24x1xf32>
    %cst_28 = arith.constant 1.280000e+02 : f32
    %58 = vector.broadcast %cst_28 : f32 to vector<24x1xf32>
    %59 = arith.divf %57, %58 : vector<24x1xf32>
    %60 = vector.broadcast %59 : vector<24x1xf32> to vector<24x128xf32>
    %61 = arith.subf %53, %60 : vector<24x128xf32>
    %62 = arith.mulf %61, %61 : vector<24x128xf32>
    %cst_29 = arith.constant dense<0.000000e+00> : vector<24xf32>
    %63 = vector.multi_reduction <add>, %62, %cst_29 [1] : vector<24x128xf32> to vector<24xf32>
    %64 = vector.shape_cast %63 : vector<24xf32> to vector<24x1xf32>
    %cst_30 = arith.constant 1.280000e+02 : f32
    %65 = vector.broadcast %cst_30 : f32 to vector<24x1xf32>
    %66 = arith.divf %64, %65 : vector<24x1xf32>
    %67 = vector.broadcast %59 : vector<24x1xf32> to vector<24x128xf32>
    %68 = arith.subf %53, %67 : vector<24x128xf32>
    %cst_31 = arith.constant 9.99999974E-6 : f32
    %69 = vector.broadcast %cst_31 : f32 to vector<24x1xf32>
    %70 = arith.addf %66, %69 : vector<24x1xf32>
    %71 = math.rsqrt %70 : vector<24x1xf32>
    %72 = vector.broadcast %71 : vector<24x1xf32> to vector<24x128xf32>
    %73 = arith.mulf %68, %72 : vector<24x128xf32>
    %74 = vector.broadcast %54 : vector<1x128xf32> to vector<24x128xf32>
    %75 = arith.mulf %73, %74 : vector<24x128xf32>
    %76 = vector.broadcast %55 : vector<1x128xf32> to vector<24x128xf32>
    %77 = arith.addf %75, %76 : vector<24x128xf32>
    %78 = arith.truncf %77 : vector<24x128xf32> to vector<24x128xbf16>
    %c0_32 = arith.constant 0 : index
    %c0_33 = arith.constant 0 : index
    %79 = vector.load %arg11[%c0_32, %c0_33] : memref<128x128xbf16, #tpu.memory_space<vmem>>, vector<128x128xbf16>
    %cst_34 = arith.constant dense<0.000000e+00> : vector<24x128xf32>
    %80 = tpu.matmul %78, %79, %cst_34 {dimension_numbers = #tpu.dot_dimension_numbers<[1], [0], [0], [1], [0, 0, 1, 1], [], []>} : vector<24x128xbf16>, vector<128x128xbf16>, vector<24x128xf32> -> vector<24x128xf32>
    %c0_35 = arith.constant 0 : index
    %c0_36 = arith.constant 0 : index
    %81 = vector.load %arg12[%c0_35, %c0_36] : memref<1x128xf32, #tpu.memory_space<vmem>>, vector<1x128xf32>
    %82 = vector.broadcast %81 : vector<1x128xf32> to vector<24x128xf32>
    %83 = arith.addf %80, %82 : vector<24x128xf32>
    %cst_37 = arith.constant 5.000000e-01 : f32
    %84 = vector.broadcast %cst_37 : f32 to vector<24x128xf32>
    %85 = arith.mulf %84, %83 : vector<24x128xf32>
    %cst_38 = arith.constant 0.707106769 : f32
    %86 = vector.broadcast %cst_38 : f32 to vector<24x128xf32>
    %87 = arith.mulf %83, %86 : vector<24x128xf32>
    %88 = math.absf %87 : vector<24x128xf32>
    %cst_39 = arith.constant 0.327591091 : f32
    %89 = vector.broadcast %cst_39 : f32 to vector<24x128xf32>
    %90 = arith.mulf %89, %88 : vector<24x128xf32>
    %cst_40 = arith.constant 1.000000e+00 : f32
    %91 = vector.broadcast %cst_40 : f32 to vector<24x128xf32>
    %92 = arith.addf %91, %90 : vector<24x128xf32>
    %cst_41 = arith.constant 1.000000e+00 : f32
    %93 = vector.broadcast %cst_41 : f32 to vector<24x128xf32>
    %94 = arith.divf %93, %92 : vector<24x128xf32>
    %cst_42 = arith.constant 1.06140542 : f32
    %95 = vector.broadcast %cst_42 : f32 to vector<24x128xf32>
    %96 = arith.mulf %95, %94 : vector<24x128xf32>
    %cst_43 = arith.constant -1.45315206 : f32
    %97 = vector.broadcast %cst_43 : f32 to vector<24x128xf32>
    %98 = arith.addf %96, %97 : vector<24x128xf32>
    %99 = arith.mulf %98, %94 : vector<24x128xf32>
    %cst_44 = arith.constant 1.42141378 : f32
    %100 = vector.broadcast %cst_44 : f32 to vector<24x128xf32>
    %101 = arith.addf %99, %100 : vector<24x128xf32>
    %102 = arith.mulf %101, %94 : vector<24x128xf32>
    %cst_45 = arith.constant -0.284496725 : f32
    %103 = vector.broadcast %cst_45 : f32 to vector<24x128xf32>
    %104 = arith.addf %102, %103 : vector<24x128xf32>
    %105 = arith.mulf %104, %94 : vector<24x128xf32>
    %cst_46 = arith.constant 0.254829586 : f32
    %106 = vector.broadcast %cst_46 : f32 to vector<24x128xf32>
    %107 = arith.addf %105, %106 : vector<24x128xf32>
    %108 = arith.mulf %107, %94 : vector<24x128xf32>
    %cst_47 = arith.constant 0.000000e+00 : f32
    %109 = vector.broadcast %cst_47 : f32 to vector<24x128xf32>
    %110 = arith.subf %109, %88 : vector<24x128xf32>
    %111 = arith.mulf %110, %88 : vector<24x128xf32>
    %112 = math.exp %111 : vector<24x128xf32>
    %113 = arith.mulf %108, %112 : vector<24x128xf32>
    %cst_48 = arith.constant 1.000000e+00 : f32
    %114 = vector.broadcast %cst_48 : f32 to vector<24x128xf32>
    %115 = arith.subf %114, %113 : vector<24x128xf32>
    %cst_49 = arith.constant 0.000000e+00 : f32
    %116 = vector.broadcast %cst_49 : f32 to vector<24x128xf32>
    %117 = arith.cmpf oge, %87, %116 : vector<24x128xf32>
    %cst_50 = arith.constant 0.000000e+00 : f32
    %118 = vector.broadcast %cst_50 : f32 to vector<24x128xf32>
    %119 = arith.subf %118, %115 : vector<24x128xf32>
    %120 = arith.select %117, %115, %119 : vector<24x128xi1>, vector<24x128xf32>
    %cst_51 = arith.constant 1.000000e+00 : f32
    %121 = vector.broadcast %cst_51 : f32 to vector<24x128xf32>
    %122 = arith.addf %121, %120 : vector<24x128xf32>
    %123 = arith.mulf %85, %122 : vector<24x128xf32>
    %124 = arith.truncf %123 : vector<24x128xf32> to vector<24x128xbf16>
    %c0_52 = arith.constant 0 : index
    %c0_53 = arith.constant 0 : index
    %125 = vector.load %arg13[%c0_52, %c0_53] : memref<128x128xbf16, #tpu.memory_space<vmem>>, vector<128x128xbf16>
    %cst_54 = arith.constant dense<0.000000e+00> : vector<24x128xf32>
    %126 = tpu.matmul %124, %125, %cst_54 {dimension_numbers = #tpu.dot_dimension_numbers<[1], [0], [0], [1], [0, 0, 1, 1], [], []>} : vector<24x128xbf16>, vector<128x128xbf16>, vector<24x128xf32> -> vector<24x128xf32>
    %c0_55 = arith.constant 0 : index
    %c0_56 = arith.constant 0 : index
    %127 = vector.load %arg14[%c0_55, %c0_56] : memref<1x128xf32, #tpu.memory_space<vmem>>, vector<1x128xf32>
    %128 = vector.broadcast %127 : vector<1x128xf32> to vector<24x128xf32>
    %129 = arith.addf %126, %128 : vector<24x128xf32>
    %130 = arith.addf %77, %129 : vector<24x128xf32>
    %c0_57 = arith.constant 0 : index
    %c0_58 = arith.constant 0 : index
    %131 = vector.load %arg15[%c0_57, %c0_58] : memref<1x128xf32, #tpu.memory_space<vmem>>, vector<1x128xf32>
    %c0_59 = arith.constant 0 : index
    %c0_60 = arith.constant 0 : index
    %132 = vector.load %arg16[%c0_59, %c0_60] : memref<1x128xf32, #tpu.memory_space<vmem>>, vector<1x128xf32>
    %cst_61 = arith.constant dense<0.000000e+00> : vector<24xf32>
    %133 = vector.multi_reduction <add>, %130, %cst_61 [1] : vector<24x128xf32> to vector<24xf32>
    %134 = vector.shape_cast %133 : vector<24xf32> to vector<24x1xf32>
    %cst_62 = arith.constant 1.280000e+02 : f32
    %135 = vector.broadcast %cst_62 : f32 to vector<24x1xf32>
    %136 = arith.divf %134, %135 : vector<24x1xf32>
    %137 = vector.broadcast %136 : vector<24x1xf32> to vector<24x128xf32>
    %138 = arith.subf %130, %137 : vector<24x128xf32>
    %139 = arith.mulf %138, %138 : vector<24x128xf32>
    %cst_63 = arith.constant dense<0.000000e+00> : vector<24xf32>
    %140 = vector.multi_reduction <add>, %139, %cst_63 [1] : vector<24x128xf32> to vector<24xf32>
    %141 = vector.shape_cast %140 : vector<24xf32> to vector<24x1xf32>
    %cst_64 = arith.constant 1.280000e+02 : f32
    %142 = vector.broadcast %cst_64 : f32 to vector<24x1xf32>
    %143 = arith.divf %141, %142 : vector<24x1xf32>
    %144 = vector.broadcast %136 : vector<24x1xf32> to vector<24x128xf32>
    %145 = arith.subf %130, %144 : vector<24x128xf32>
    %cst_65 = arith.constant 9.99999974E-6 : f32
    %146 = vector.broadcast %cst_65 : f32 to vector<24x1xf32>
    %147 = arith.addf %143, %146 : vector<24x1xf32>
    %148 = math.rsqrt %147 : vector<24x1xf32>
    %149 = vector.broadcast %148 : vector<24x1xf32> to vector<24x128xf32>
    %150 = arith.mulf %145, %149 : vector<24x128xf32>
    %151 = vector.broadcast %131 : vector<1x128xf32> to vector<24x128xf32>
    %152 = arith.mulf %150, %151 : vector<24x128xf32>
    %153 = vector.broadcast %132 : vector<1x128xf32> to vector<24x128xf32>
    %154 = arith.addf %152, %153 : vector<24x128xf32>
    %155 = vector.shape_cast %154 : vector<24x128xf32> to vector<3x8x128xf32>
    %c0_66 = arith.constant 0 : index
    %c0_67 = arith.constant 0 : index
    %c0_68 = arith.constant 0 : index
    %156 = vector.load %arg17[%c0_66, %c0_67, %c0_68] : memref<3x8x128xf32, #tpu.memory_space<vmem>>, vector<3x8x128xf32>
    tpu.vector_store %arg17[%c0_66, %c0_67, %c0_68], %155 {strides = array<i32>} : memref<3x8x128xf32, #tpu.memory_space<vmem>>, vector<3x8x128xf32>,
    return
  }
  func.func @transform_0(%arg0: i32) -> (i32, i32, i32) {
    %c0_i32 = arith.constant 0 : i32
    %c0_i32_0 = arith.constant 0 : i32
    %c0_i32_1 = arith.constant 0 : i32
    return %arg0, %c0_i32, %c0_i32_0 : i32, i32, i32
  }
  func.func @transform_1(%arg0: i32) -> (i32, i32) {
    %c0_i32 = arith.constant 0 : i32
    %c0_i32_0 = arith.constant 0 : i32
    %c0_i32_1 = arith.constant 0 : i32
    return %c0_i32, %c0_i32_0 : i32, i32
  }
  func.func @transform_2(%arg0: i32) -> (i32, i32) {
    %c0_i32 = arith.constant 0 : i32
    %c0_i32_0 = arith.constant 0 : i32
    %c0_i32_1 = arith.constant 0 : i32
    return %c0_i32, %c0_i32_0 : i32, i32
  }
  func.func @transform_3(%arg0: i32) -> (i32, i32) {
    %c0_i32 = arith.constant 0 : i32
    %c0_i32_0 = arith.constant 0 : i32
    %c0_i32_1 = arith.constant 0 : i32
    return %c0_i32, %c0_i32_0 : i32, i32
  }
  func.func @transform_4(%arg0: i32) -> (i32, i32) {
    %c0_i32 = arith.constant 0 : i32
    %c0_i32_0 = arith.constant 0 : i32
    %c0_i32_1 = arith.constant 0 : i32
    return %c0_i32, %c0_i32_0 : i32, i32
  }
  func.func @transform_5(%arg0: i32) -> (i32, i32) {
    %c0_i32 = arith.constant 0 : i32
    %c0_i32_0 = arith.constant 0 : i32
    %c0_i32_1 = arith.constant 0 : i32
    return %c0_i32, %c0_i32_0 : i32, i32
  }
  func.func @transform_6(%arg0: i32) -> (i32, i32) {
    %c0_i32 = arith.constant 0 : i32
    %c0_i32_0 = arith.constant 0 : i32
    %c0_i32_1 = arith.constant 0 : i32
    return %c0_i32, %c0_i32_0 : i32, i32
  }
  func.func @transform_7(%arg0: i32) -> (i32, i32) {
    %c0_i32 = arith.constant 0 : i32
    %c0_i32_0 = arith.constant 0 : i32
    %c0_i32_1 = arith.constant 0 : i32
    return %c0_i32, %c0_i32_0 : i32, i32
  }
  func.func @transform_8(%arg0: i32) -> (i32, i32) {
    %c0_i32 = arith.constant 0 : i32
    %c0_i32_0 = arith.constant 0 : i32
    %c0_i32_1 = arith.constant 0 : i32
    return %c0_i32, %c0_i32_0 : i32, i32
  }
  func.func @transform_9(%arg0: i32) -> (i32, i32) {
    %c0_i32 = arith.constant 0 : i32
    %c0_i32_0 = arith.constant 0 : i32
    %c0_i32_1 = arith.constant 0 : i32
    return %c0_i32, %c0_i32_0 : i32, i32
  }
  func.func @transform_10(%arg0: i32) -> (i32, i32) {
    %c0_i32 = arith.constant 0 : i32
    %c0_i32_0 = arith.constant 0 : i32
    %c0_i32_1 = arith.constant 0 : i32
    return %c0_i32, %c0_i32_0 : i32, i32
  }
  func.func @transform_11(%arg0: i32) -> (i32, i32) {
    %c0_i32 = arith.constant 0 : i32
    %c0_i32_0 = arith.constant 0 : i32
    %c0_i32_1 = arith.constant 0 : i32
    return %c0_i32, %c0_i32_0 : i32, i32
  }
  func.func @transform_12(%arg0: i32) -> (i32, i32) {
    %c0_i32 = arith.constant 0 : i32
    %c0_i32_0 = arith.constant 0 : i32
    %c0_i32_1 = arith.constant 0 : i32
    return %c0_i32, %c0_i32_0 : i32, i32
  }
  func.func @transform_13(%arg0: i32) -> (i32, i32) {
    %c0_i32 = arith.constant 0 : i32
    %c0_i32_0 = arith.constant 0 : i32
    %c0_i32_1 = arith.constant 0 : i32
    return %c0_i32, %c0_i32_0 : i32, i32
  }
  func.func @transform_14(%arg0: i32) -> (i32, i32) {
    %c0_i32 = arith.constant 0 : i32
    %c0_i32_0 = arith.constant 0 : i32
    %c0_i32_1 = arith.constant 0 : i32
    return %c0_i32, %c0_i32_0 : i32, i32
  }
  func.func @transform_15(%arg0: i32) -> (i32, i32) {
    %c0_i32 = arith.constant 0 : i32
    %c0_i32_0 = arith.constant 0 : i32
    %c0_i32_1 = arith.constant 0 : i32
    return %c0_i32, %c0_i32_0 : i32, i32
  }
  func.func @transform_16(%arg0: i32) -> (i32, i32, i32) {
    %c0_i32 = arith.constant 0 : i32
    %c0_i32_0 = arith.constant 0 : i32
    %c0_i32_1 = arith.constant 0 : i32
    return %arg0, %c0_i32, %c0_i32_0 : i32, i32, i32
  }
}

</mosaic_0001>

<llo_original>
// kernel: tpu_custom_call.1
$region0: #{tpu_custom_call.1}
  #allocation0 [shape = 'u32[]', space=smem, size = 0x4, offset = 0x4, fixed_abs, tag = 'smem constant byte address 0x4 - core index']
  #allocation1 [shape = 'u32[72,128]{1,0:T(1,128)}', space=vmem, size = 0x9000, scoped, tag = 'internal scratch']
  %s0 = inlined_call_operand.hbm [shape: f32[6,8,128], index: 0, kind: input, shape index: {}]
  %s1 = inlined_call_operand.vmem [shape: f32[128,128], index: 1, kind: input, shape index: {}]
  %s2 = inlined_call_operand.vmem [shape: f32[128,16], index: 2, kind: input, shape index: {}]
  %s3 = inlined_call_operand.vmem [shape: f32[16,128], index: 3, kind: input, shape index: {}]
  %s4 = inlined_call_operand.hbm [shape: bf16[128,384], index: 4, kind: input, shape index: {}]
  %s5 = inlined_call_operand.vmem [shape: f32[1,384], index: 5, kind: input, shape index: {}]
  %s6 = inlined_call_operand.hbm [shape: bf16[128,128], index: 6, kind: input, shape index: {}]
  %s7 = inlined_call_operand.vmem [shape: f32[1,128], index: 7, kind: input, shape index: {}]
  %s8 = inlined_call_operand.vmem [shape: f32[1,128], index: 8, kind: input, shape index: {}]
  %s9 = inlined_call_operand.vmem [shape: f32[1,128], index: 9, kind: input, shape index: {}]
  %s10 = inlined_call_operand.hbm [shape: bf16[128,128], index: 10, kind: input, shape index: {}]
  %s11 = inlined_call_operand.vmem [shape: f32[1,128], index: 11, kind: input, shape index: {}]
  %s12 = inlined_call_operand.hbm [shape: bf16[128,128], index: 12, kind: input, shape index: {}]
  %s13 = inlined_call_operand.vmem [shape: f32[1,128], index: 13, kind: input, shape index: {}]
  %s14 = inlined_call_operand.vmem [shape: f32[1,128], index: 14, kind: input, shape index: {}]
  %s15 = inlined_call_operand.vmem [shape: f32[1,128], index: 15, kind: input, shape index: {}]
  %s16 = inlined_call_operand.hbm [shape: f32[6,8,128], index: 16, kind: output, shape index: {}]
  %s17 = sld [smem:[#allocation0]]
  $region117: #{tpu_custom_call.1} parent=0
    _
  %s19 = ssub.s32 1, %s17
  %s20 = scalar_select 0, %s19, %s17
  $region1: #{tpu_custom_call.1} parent=0
    #allocation2 [shape = 'u8[24576]{0}', space=vmem, size = 0x6000, scoped, tag = 'input window, operand 0']
    #allocation3 [shape = 's32[2]{0}', space=sflag, size = 0x8, scoped, tag = 'scoped memory for tpu_custom_call.1']
    #allocation4 [shape = 's32[2]{0}', space=sflag, size = 0x8, scoped, tag = 'scoped memory for tpu_custom_call.1']
    #allocation5 [shape = 'u8[98304]{0}', space=vmem, size = 0x18000, scoped, tag = 'input window, operand 4, single buffered']
    #allocation6 [shape = 's32[1]{0}', space=sflag, size = 0x4, scoped, tag = 'scoped memory for tpu_custom_call.1']
    #allocation7 [shape = 'u8[32768]{0}', space=vmem, size = 0x8000, scoped, tag = 'input window, operand 6, single buffered']
    #allocation8 [shape = 'u8[32768]{0}', space=vmem, size = 0x8000, scoped, tag = 'input window, operand 10, single buffered']
    #allocation9 [shape = 's32[1]{0}', space=sflag, size = 0x4, scoped, tag = 'scoped memory for tpu_custom_call.1']
    #allocation10 [shape = 'u8[32768]{0}', space=vmem, size = 0x8000, scoped, tag = 'input window, operand 12, single buffered']
    #allocation11 [shape = 'u8[24576]{0}', space=vmem, size = 0x6000, scoped, tag = 'output window, operand 0']
    %21 = vsyncpa [#allocation3], 0
    %s22 = scalar_lea.sflag [#allocation3], 1
    %23 = vsyncpa %s22, 0
    %24 = vsyncpa [#allocation6], 0
    %25 = vsyncpa [#allocation9], 0
    %26 = vsyncpa [#allocation4], 0
    %s27 = scalar_lea.sflag [#allocation4], 1
    %28 = vsyncpa %s27, 0
    loop: start=0, step=1, limit=4
    $region2: #{tpu_custom_call.1} parent=1 // loop_pre_header
      _
    $region3: #{tpu_custom_call.1} parent=1 // loop_header
      %s30 = sphi 0, %s34
      %p31 = scmp.ge.s32.totalorder %s30, 4
      %s40 = sphi 0, %s42
      %s43 = sphi 0, %s40
      %s44 = sphi 0, %s43
      %s60 = sphi 0, %s44
      %s64 = sphi 0, %s64
      %s66 = sphi 0, %s64
      %s67 = sphi 0, %s66
      %s81 = sphi 0, %s67
      %s85 = sphi 0, %s85
      %s87 = sphi 0, %s85
      %s88 = sphi 0, %s87
      %s102 = sphi 0, %s88
      %s106 = sphi 0, %s106
      %s108 = sphi 0, %s106
      %s109 = sphi 0, %s108
      %s123 = sphi 0, %s109
      %s127 = sphi 0, %s127
      %s129 = sphi 0, %s127
      %s130 = sphi 0, %s129
      %s144 = sphi 0, %s130
      %s148 = sphi 0, %s148
      %s150 = sphi 0, %s148
      %s151 = sphi 0, %s150
      %s165 = sphi 0, %s151
      %s169 = sphi 0, %s169
      %s171 = sphi 0, %s169
      %s172 = sphi 0, %s171
      %s186 = sphi 0, %s172
      %s190 = sphi 0, %s190
      %s192 = sphi 0, %s190
      %s193 = sphi 0, %s192
      %s207 = sphi 0, %s193
      %s211 = sphi 0, %s211
      %s213 = sphi 0, %s211
      %s214 = sphi 0, %s213
      %s228 = sphi 0, %s214
      %s232 = sphi 0, %s232
      %s234 = sphi 0, %s232
      %s235 = sphi 0, %s234
      %s249 = sphi 0, %s235
      %s253 = sphi 0, %s253
      %s255 = sphi 0, %s253
      %s256 = sphi 0, %s255
      %s270 = sphi 0, %s256
      %s274 = sphi 0, %s274
      %s276 = sphi 0, %s274
      %s277 = sphi 0, %s276
      %s291 = sphi 0, %s277
      %s295 = sphi 0, %s295
      %s297 = sphi 0, %s295
      %s298 = sphi 0, %s297
      %s312 = sphi 0, %s298
      %s316 = sphi 0, %s316
      %s318 = sphi 0, %s316
      %s319 = sphi 0, %s318
      %s333 = sphi 0, %s319
      %s337 = sphi 0, %s337
      %s339 = sphi 0, %s337
      %s340 = sphi 0, %s339
      %s354 = sphi 0, %s340
      %s358 = sphi 0, %s358
      %s360 = sphi 0, %s358
      %s361 = sphi 0, %s360
      %s375 = sphi 0, %s361
      %s381 = sphi 0, %s383
      %s384 = sphi 0, %s381
      %s385 = sphi 0, %s384
      %s401 = sphi 0, %s385
    $region4: #{tpu_custom_call.1} parent=1 // loop_header_branch
      %33 = sbr.rel (%p31) target = $region8
    $region5: #{tpu_custom_call.1} parent=1 // loop_body
      %s35 = ssub.s32 %s30, 1
      %s36 = ssub.s32 %s30, 2
      %s37 = sadd.s32 %s30, 1
      %s38 = ssub.s32 %s30, %s37
      %p39 = scmp.eq.s32.totalorder %s38, 0
      %s41 = sadd.s32 %s40, 1
      %s42 = scalar_select %p39, %s40, %s41
      %p45 = pneg %p39
      %p46 = scmp.eq.s32.totalorder %s30, 1
      %p47 = por %p45, %p46
      %p48 = scmp.ne.s32.totalorder %s40, %s43
      %p49 = scmp.eq.s32.totalorder %s30, 0
      %p50 = por %p48, %p49
      %p51 = scmp.ne.s32.totalorder %s40, %s43
      %p52 = scmp.eq.s32.totalorder %s35, 1
      %p53 = por %p51, %p52
      %p54 = scmp.ne.s32.totalorder %s43, %s44
      %p55 = scmp.eq.s32.totalorder %s35, 0
      %p56 = por %p54, %p55
      %p57 = scmp.ne.s32.totalorder %s43, %s44
      %p58 = scmp.eq.s32.totalorder %s36, 1
      %p59 = por %p57, %p58
      %p61 = scmp.ne.s32.totalorder %s44, %s60
      %p62 = scmp.eq.s32.totalorder %s36, 0
      %p63 = por %p61, %p62
      %s65 = sadd.s32 %s64, 1
      %p68 = scmp.eq.s32.totalorder %s30, 1
      %p69 = scmp.ne.s32.totalorder %s64, %s66
      %p70 = scmp.eq.s32.totalorder %s30, 0
      %p71 = por %p69, %p70
      %p72 = scmp.ne.s32.totalorder %s64, %s66
      %p73 = scmp.eq.s32.totalorder %s35, 1
      %p74 = por %p72, %p73
      %p75 = scmp.ne.s32.totalorder %s66, %s67
      %p76 = scmp.eq.s32.totalorder %s35, 0
      %p77 = por %p75, %p76
      %p78 = scmp.ne.s32.totalorder %s66, %s67
      %p79 = scmp.eq.s32.totalorder %s36, 1
      %p80 = por %p78, %p79
      %p82 = scmp.ne.s32.totalorder %s67, %s81
      %p83 = scmp.eq.s32.totalorder %s36, 0
      %p84 = por %p82, %p83
      %s86 = sadd.s32 %s85, 1
      %p89 = scmp.eq.s32.totalorder %s30, 1
      %p90 = scmp.ne.s32.totalorder %s85, %s87
      %p91 = scmp.eq.s32.totalorder %s30, 0
      %p92 = por %p90, %p91
      %p93 = scmp.ne.s32.totalorder %s85, %s87
      %p94 = scmp.eq.s32.totalorder %s35, 1
      %p95 = por %p93, %p94
      %p96 = scmp.ne.s32.totalorder %s87, %s88
      %p97 = scmp.eq.s32.totalorder %s35, 0
      %p98 = por %p96, %p97
      %p99 = scmp.ne.s32.totalorder %s87, %s88
      %p100 = scmp.eq.s32.totalorder %s36, 1
      %p101 = por %p99, %p100
      %p103 = scmp.ne.s32.totalorder %s88, %s102
      %p104 = scmp.eq.s32.totalorder %s36, 0
      %p105 = por %p103, %p104
      %s107 = sadd.s32 %s106, 1
      %p110 = scmp.eq.s32.totalorder %s30, 1
      %p111 = scmp.ne.s32.totalorder %s106, %s108
      %p112 = scmp.eq.s32.totalorder %s30, 0
      %p113 = por %p111, %p112
      %p114 = scmp.ne.s32.totalorder %s106, %s108
      %p115 = scmp.eq.s32.totalorder %s35, 1
      %p116 = por %p114, %p115
      %p117 = scmp.ne.s32.totalorder %s108, %s109
      %p118 = scmp.eq.s32.totalorder %s35, 0
      %p119 = por %p117, %p118
      %p120 = scmp.ne.s32.totalorder %s108, %s109
      %p121 = scmp.eq.s32.totalorder %s36, 1
      %p122 = por %p120, %p121
      %p124 = scmp.ne.s32.totalorder %s109, %s123
      %p125 = scmp.eq.s32.totalorder %s36, 0
      %p126 = por %p124, %p125
      %s128 = sadd.s32 %s127, 1
      %p131 = scmp.eq.s32.totalorder %s30, 1
      %p132 = scmp.ne.s32.totalorder %s127, %s129
      %p133 = scmp.eq.s32.totalorder %s30, 0
      %p134 = por %p132, %p133
      %p135 = scmp.ne.s32.totalorder %s127, %s129
      %p136 = scmp.eq.s32.totalorder %s35, 1
      %p137 = por %p135, %p136
      %p138 = scmp.ne.s32.totalorder %s129, %s130
      %p139 = scmp.eq.s32.totalorder %s35, 0
      %p140 = por %p138, %p139
      %p141 = scmp.ne.s32.totalorder %s129, %s130
      %p142 = scmp.eq.s32.totalorder %s36, 1
      %p143 = por %p141, %p142
      %p145 = scmp.ne.s32.totalorder %s130, %s144
      %p146 = scmp.eq.s32.totalorder %s36, 0
      %p147 = por %p145, %p146
      %s149 = sadd.s32 %s148, 1
      %p152 = scmp.eq.s32.totalorder %s30, 1
      %p153 = scmp.ne.s32.totalorder %s148, %s150
      %p154 = scmp.eq.s32.totalorder %s30, 0
      %p155 = por %p153, %p154
      %p156 = scmp.ne.s32.totalorder %s148, %s150
      %p157 = scmp.eq.s32.totalorder %s35, 1
      %p158 = por %p156, %p157
      %p159 = scmp.ne.s32.totalorder %s150, %s151
      %p160 = scmp.eq.s32.totalorder %s35, 0
      %p161 = por %p159, %p160
      %p162 = scmp.ne.s32.totalorder %s150, %s151
      %p163 = scmp.eq.s32.totalorder %s36, 1
      %p164 = por %p162, %p163
      %p166 = scmp.ne.s32.totalorder %s151, %s165
      %p167 = scmp.eq.s32.totalorder %s36, 0
      %p168 = por %p166, %p167
      %s170 = sadd.s32 %s169, 1
      %p173 = scmp.eq.s32.totalorder %s30, 1
      %p174 = scmp.ne.s32.totalorder %s169, %s171
      %p175 = scmp.eq.s32.totalorder %s30, 0
      %p176 = por %p174, %p175
      %p177 = scmp.ne.s32.totalorder %s169, %s171
      %p178 = scmp.eq.s32.totalorder %s35, 1
      %p179 = por %p177, %p178
      %p180 = scmp.ne.s32.totalorder %s171, %s172
      %p181 = scmp.eq.s32.totalorder %s35, 0
      %p182 = por %p180, %p181
      %p183 = scmp.ne.s32.totalorder %s171, %s172
      %p184 = scmp.eq.s32.totalorder %s36, 1
      %p185 = por %p183, %p184
      %p187 = scmp.ne.s32.totalorder %s172, %s186
      %p188 = scmp.eq.s32.totalorder %s36, 0
      %p189 = por %p187, %p188
      %s191 = sadd.s32 %s190, 1
      %p194 = scmp.eq.s32.totalorder %s30, 1
      %p195 = scmp.ne.s32.totalorder %s190, %s192
      %p196 = scmp.eq.s32.totalorder %s30, 0
      %p197 = por %p195, %p196
      %p198 = scmp.ne.s32.totalorder %s190, %s192
      %p199 = scmp.eq.s32.totalorder %s35, 1
      %p200 = por %p198, %p199
      %p201 = scmp.ne.s32.totalorder %s192, %s193
      %p202 = scmp.eq.s32.totalorder %s35, 0
      %p203 = por %p201, %p202
      %p204 = scmp.ne.s32.totalorder %s192, %s193
      %p205 = scmp.eq.s32.totalorder %s36, 1
      %p206 = por %p204, %p205
      %p208 = scmp.ne.s32.totalorder %s193, %s207
      %p209 = scmp.eq.s32.totalorder %s36, 0
      %p210 = por %p208, %p209
      %s212 = sadd.s32 %s211, 1
      %p215 = scmp.eq.s32.totalorder %s30, 1
      %p216 = scmp.ne.s32.totalorder %s211, %s213
      %p217 = scmp.eq.s32.totalorder %s30, 0
      %p218 = por %p216, %p217
      %p219 = scmp.ne.s32.totalorder %s211, %s213
      %p220 = scmp.eq.s32.totalorder %s35, 1
      %p221 = por %p219, %p220
      %p222 = scmp.ne.s32.totalorder %s213, %s214
      %p223 = scmp.eq.s32.totalorder %s35, 0
      %p224 = por %p222, %p223
      %p225 = scmp.ne.s32.totalorder %s213, %s214
      %p226 = scmp.eq.s32.totalorder %s36, 1
      %p227 = por %p225, %p226
      %p229 = scmp.ne.s32.totalorder %s214, %s228
      %p230 = scmp.eq.s32.totalorder %s36, 0
      %p231 = por %p229, %p230
      %s233 = sadd.s32 %s232, 1
      %p236 = scmp.eq.s32.totalorder %s30, 1
      %p237 = scmp.ne.s32.totalorder %s232, %s234
      %p238 = scmp.eq.s32.totalorder %s30, 0
      %p239 = por %p237, %p238
      %p240 = scmp.ne.s32.totalorder %s232, %s234
      %p241 = scmp.eq.s32.totalorder %s35, 1
      %p242 = por %p240, %p241
      %p243 = scmp.ne.s32.totalorder %s234, %s235
      %p244 = scmp.eq.s32.totalorder %s35, 0
      %p245 = por %p243, %p244
      %p246 = scmp.ne.s32.totalorder %s234, %s235
      %p247 = scmp.eq.s32.totalorder %s36, 1
      %p248 = por %p246, %p247
      %p250 = scmp.ne.s32.totalorder %s235, %s249
      %p251 = scmp.eq.s32.totalorder %s36, 0
      %p252 = por %p250, %p251
      %s254 = sadd.s32 %s253, 1
      %p257 = scmp.eq.s32.totalorder %s30, 1
      %p258 = scmp.ne.s32.totalorder %s253, %s255
      %p259 = scmp.eq.s32.totalorder %s30, 0
      %p260 = por %p258, %p259
      %p261 = scmp.ne.s32.totalorder %s253, %s255
      %p262 = scmp.eq.s32.totalorder %s35, 1
      %p263 = por %p261, %p262
      %p264 = scmp.ne.s32.totalorder %s255, %s256
      %p265 = scmp.eq.s32.totalorder %s35, 0
      %p266 = por %p264, %p265
      %p267 = scmp.ne.s32.totalorder %s255, %s256
      %p268 = scmp.eq.s32.totalorder %s36, 1
      %p269 = por %p267, %p268
      %p271 = scmp.ne.s32.totalorder %s256, %s270
      %p272 = scmp.eq.s32.totalorder %s36, 0
      %p273 = por %p271, %p272
      %s275 = sadd.s32 %s274, 1
      %p278 = scmp.eq.s32.totalorder %s30, 1
      %p279 = scmp.ne.s32.totalorder %s274, %s276
      %p280 = scmp.eq.s32.totalorder %s30, 0
      %p281 = por %p279, %p280
      %p282 = scmp.ne.s32.totalorder %s274, %s276
      %p283 = scmp.eq.s32.totalorder %s35, 1
      %p284 = por %p282, %p283
      %p285 = scmp.ne.s32.totalorder %s276, %s277
      %p286 = scmp.eq.s32.totalorder %s35, 0
      %p287 = por %p285, %p286
      %p288 = scmp.ne.s32.totalorder %s276, %s277
      %p289 = scmp.eq.s32.totalorder %s36, 1
      %p290 = por %p288, %p289
      %p292 = scmp.ne.s32.totalorder %s277, %s291
      %p293 = scmp.eq.s32.totalorder %s36, 0
      %p294 = por %p292, %p293
      %s296 = sadd.s32 %s295, 1
      %p299 = scmp.eq.s32.totalorder %s30, 1
      %p300 = scmp.ne.s32.totalorder %s295, %s297
      %p301 = scmp.eq.s32.totalorder %s30, 0
      %p302 = por %p300, %p301
      %p303 = scmp.ne.s32.totalorder %s295, %s297
      %p304 = scmp.eq.s32.totalorder %s35, 1
      %p305 = por %p303, %p304
      %p306 = scmp.ne.s32.totalorder %s297, %s298
      %p307 = scmp.eq.s32.totalorder %s35, 0
      %p308 = por %p306, %p307
      %p309 = scmp.ne.s32.totalorder %s297, %s298
      %p310 = scmp.eq.s32.totalorder %s36, 1
      %p311 = por %p309, %p310
      %p313 = scmp.ne.s32.totalorder %s298, %s312
      %p314 = scmp.eq.s32.totalorder %s36, 0
      %p315 = por %p313, %p314
      %s317 = sadd.s32 %s316, 1
      %p320 = scmp.eq.s32.totalorder %s30, 1
      %p321 = scmp.ne.s32.totalorder %s316, %s318
      %p322 = scmp.eq.s32.totalorder %s30, 0
      %p323 = por %p321, %p322
      %p324 = scmp.ne.s32.totalorder %s316, %s318
      %p325 = scmp.eq.s32.totalorder %s35, 1
      %p326 = por %p324, %p325
      %p327 = scmp.ne.s32.totalorder %s318, %s319
      %p328 = scmp.eq.s32.totalorder %s35, 0
      %p329 = por %p327, %p328
      %p330 = scmp.ne.s32.totalorder %s318, %s319
      %p331 = scmp.eq.s32.totalorder %s36, 1
      %p332 = por %p330, %p331
      %p334 = scmp.ne.s32.totalorder %s319, %s333
      %p335 = scmp.eq.s32.totalorder %s36, 0
      %p336 = por %p334, %p335
      %s338 = sadd.s32 %s337, 1
      %p341 = scmp.eq.s32.totalorder %s30, 1
      %p342 = scmp.ne.s32.totalorder %s337, %s339
      %p343 = scmp.eq.s32.totalorder %s30, 0
      %p344 = por %p342, %p343
      %p345 = scmp.ne.s32.totalorder %s337, %s339
      %p346 = scmp.eq.s32.totalorder %s35, 1
      %p347 = por %p345, %p346
      %p348 = scmp.ne.s32.totalorder %s339, %s340
      %p349 = scmp.eq.s32.totalorder %s35, 0
      %p350 = por %p348, %p349
      %p351 = scmp.ne.s32.totalorder %s339, %s340
      %p352 = scmp.eq.s32.totalorder %s36, 1
      %p353 = por %p351, %p352
      %p355 = scmp.ne.s32.totalorder %s340, %s354
      %p356 = scmp.eq.s32.totalorder %s36, 0
      %p357 = por %p355, %p356
      %s359 = sadd.s32 %s358, 1
      %p362 = scmp.eq.s32.totalorder %s30, 1
      %p363 = scmp.ne.s32.totalorder %s358, %s360
      %p364 = scmp.eq.s32.totalorder %s30, 0
      %p365 = por %p363, %p364
      %p366 = scmp.ne.s32.totalorder %s358, %s360
      %p367 = scmp.eq.s32.totalorder %s35, 1
      %p368 = por %p366, %p367
      %p369 = scmp.ne.s32.totalorder %s360, %s361
      %p370 = scmp.eq.s32.totalorder %s35, 0
      %p371 = por %p369, %p370
      %p372 = scmp.ne.s32.totalorder %s360, %s361
      %p373 = scmp.eq.s32.totalorder %s36, 1
      %p374 = por %p372, %p373
      %p376 = scmp.ne.s32.totalorder %s361, %s375
      %p377 = scmp.eq.s32.totalorder %s36, 0
      %p378 = por %p376, %p377
      %s379 = ssub.s32 %s30, %s37
      %p380 = scmp.eq.s32.totalorder %s379, 0
      %s382 = sadd.s32 %s381, 1
      %s383 = scalar_select %p380, %s381, %s382
      %p386 = pneg %p380
      %p387 = scmp.eq.s32.totalorder %s30, 1
      %p388 = por %p386, %p387
      %p389 = scmp.ne.s32.totalorder %s381, %s384
      %p390 = scmp.eq.s32.totalorder %s30, 0
      %p391 = por %p389, %p390
      %p392 = scmp.ne.s32.totalorder %s381, %s384
      %p393 = scmp.eq.s32.totalorder %s35, 1
      %p394 = por %p392, %p393
      %p395 = scmp.ne.s32.totalorder %s384, %s385
      %p396 = scmp.eq.s32.totalorder %s35, 0
      %p397 = por %p395, %p396
      %p398 = scmp.ne.s32.totalorder %s384, %s385
      %p399 = scmp.eq.s32.totalorder %s36, 1
      %p400 = por %p398, %p399
      %p402 = scmp.ne.s32.totalorder %s385, %s401
      %p403 = scmp.eq.s32.totalorder %s36, 0
      %p404 = por %p402, %p403
      %p405 = scmp.le.s32.totalorder 1, %s30
      %p406 = scmp.lt.s32.totalorder %s30, 3
      %p407 = pnand %p405, %p406
      %p408 = pneg %p407
      // Predicated region
      $region9: #{tpu_custom_call.1} parent=5 // pred_check
        _
      $region10: #{tpu_custom_call.1} parent=5 // pred_check_branch
        %410 = sbr.rel (%p407) target = $region12
      $region11: #{tpu_custom_call.1} parent=5 // pred_region
        %s411 = ssub.s32 %s30, 1
        // Predicated region
        $region13: #{tpu_custom_call.1} parent=11 // pred_check
          %p412 = pneg %p77
        $region14: #{tpu_custom_call.1} parent=11 // pred_check_branch
          %414 = sbr.rel (%p412) target = $region16
        $region15: #{tpu_custom_call.1} parent=11 // pred_region
          _
        $region16: #{tpu_custom_call.1} parent=11 // pred_fallthru
          _
        // Predicated region
        $region17: #{tpu_custom_call.1} parent=11 // pred_check
          %p415 = pneg %p98
        $region18: #{tpu_custom_call.1} parent=11 // pred_check_branch
          %417 = sbr.rel (%p415) target = $region20
        $region19: #{tpu_custom_call.1} parent=11 // pred_region
          _
        $region20: #{tpu_custom_call.1} parent=11 // pred_fallthru
          _
        // Predicated region
        $region21: #{tpu_custom_call.1} parent=11 // pred_check
          %p418 = pneg %p119
        $region22: #{tpu_custom_call.1} parent=11 // pred_check_branch
          %420 = sbr.rel (%p418) target = $region24
        $region23: #{tpu_custom_call.1} parent=11 // pred_region
          _
        $region24: #{tpu_custom_call.1} parent=11 // pred_fallthru
          _
        // Predicated region
        $region25: #{tpu_custom_call.1} parent=11 // pred_check
          %p421 = pneg %p140
        $region26: #{tpu_custom_call.1} parent=11 // pred_check_branch
          %423 = sbr.rel (%p421) target = $region28
        $region27: #{tpu_custom_call.1} parent=11 // pred_region
          %425 = vsyncadd [#allocation6], 0
          %s426 = sshll.u32 %s4, 4
          %s427 = int_to_ptr.hbm [resolvable:$true] %s426
          %s428 = sshll.u32 [#allocation5], 4
          %s429 = int_to_ptr.vmem [resolvable:$true] %s428
          %434 = dma.hbm_to_vmem [thread:$0]  %s427, 3072, %s429, [#allocation6], 192, 192, 12
        $region28: #{tpu_custom_call.1} parent=11 // pred_fallthru
          _
        // Predicated region
        $region29: #{tpu_custom_call.1} parent=11 // pred_check
          %p435 = pneg %p161
        $region30: #{tpu_custom_call.1} parent=11 // pred_check_branch
          %437 = sbr.rel (%p435) target = $region32
        $region31: #{tpu_custom_call.1} parent=11 // pred_region
          _
        $region32: #{tpu_custom_call.1} parent=11 // pred_fallthru
          _
        // Predicated region
        $region33: #{tpu_custom_call.1} parent=11 // pred_check
          %p438 = pneg %p182
        $region34: #{tpu_custom_call.1} parent=11 // pred_check_branch
          %440 = sbr.rel (%p438) target = $region36
        $region35: #{tpu_custom_call.1} parent=11 // pred_region
          %442 = vsyncadd [#allocation6], 0
          %s443 = sshll.u32 %s6, 4
          %s444 = int_to_ptr.hbm [resolvable:$true] %s443
          %s445 = sshll.u32 [#allocation7], 4
          %s446 = int_to_ptr.vmem [resolvable:$true] %s445
          %451 = dma.hbm_to_vmem [thread:$0]  %s444, 1024, %s446, [#allocation6], 64, 64, 4
        $region36: #{tpu_custom_call.1} parent=11 // pred_fallthru
          _
        // Predicated region
        $region37: #{tpu_custom_call.1} parent=11 // pred_check
          %p452 = pneg %p203
        $region38: #{tpu_custom_call.1} parent=11 // pred_check_branch
          %454 = sbr.rel (%p452) target = $region40
        $region39: #{tpu_custom_call.1} parent=11 // pred_region
          _
        $region40: #{tpu_custom_call.1} parent=11 // pred_fallthru
          _
        // Predicated region
        $region41: #{tpu_custom_call.1} parent=11 // pred_check
          %p455 = pneg %p224
        $region42: #{tpu_custom_call.1} parent=11 // pred_check_branch
          %457 = sbr.rel (%p455) target = $region44
        $region43: #{tpu_custom_call.1} parent=11 // pred_region
          _
        $region44: #{tpu_custom_call.1} parent=11 // pred_fallthru
          _
        // Predicated region
        $region45: #{tpu_custom_call.1} parent=11 // pred_check
          %p458 = pneg %p245
        $region46: #{tpu_custom_call.1} parent=11 // pred_check_branch
          %460 = sbr.rel (%p458) target = $region48
        $region47: #{tpu_custom_call.1} parent=11 // pred_region
          _
        $region48: #{tpu_custom_call.1} parent=11 // pred_fallthru
          _
        // Predicated region
        $region49: #{tpu_custom_call.1} parent=11 // pred_check
          %p461 = pneg %p266
        $region50: #{tpu_custom_call.1} parent=11 // pred_check_branch
          %463 = sbr.rel (%p461) target = $region52
        $region51: #{tpu_custom_call.1} parent=11 // pred_region
          %465 = vsyncadd [#allocation9], 0
          %s466 = sshll.u32 %s10, 4
          %s467 = int_to_ptr.hbm [resolvable:$true] %s466
          %s468 = sshll.u32 [#allocation8], 4
          %s469 = int_to_ptr.vmem [resolvable:$true] %s468
          %474 = dma.hbm_to_vmem [thread:$0]  %s467, 1024, %s469, [#allocation9], 64, 64, 4
        $region52: #{tpu_custom_call.1} parent=11 // pred_fallthru
          _
        // Predicated region
        $region53: #{tpu_custom_call.1} parent=11 // pred_check
          %p475 = pneg %p287
        $region54: #{tpu_custom_call.1} parent=11 // pred_check_branch
          %477 = sbr.rel (%p475) target = $region56
        $region55: #{tpu_custom_call.1} parent=11 // pred_region
          _
        $region56: #{tpu_custom_call.1} parent=11 // pred_fallthru
          _
        // Predicated region
        $region57: #{tpu_custom_call.1} parent=11 // pred_check
          %p478 = pneg %p308
        $region58: #{tpu_custom_call.1} parent=11 // pred_check_branch
          %480 = sbr.rel (%p478) target = $region60
        $region59: #{tpu_custom_call.1} parent=11 // pred_region
          %482 = vsyncadd [#allocation9], 0
          %s483 = sshll.u32 %s12, 4
          %s484 = int_to_ptr.hbm [resolvable:$true] %s483
          %s485 = sshll.u32 [#allocation10], 4
          %s486 = int_to_ptr.vmem [resolvable:$true] %s485
          %491 = dma.hbm_to_vmem [thread:$0]  %s484, 1024, %s486, [#allocation9], 64, 64, 4
        $region60: #{tpu_custom_call.1} parent=11 // pred_fallthru
          _
        // Predicated region
        $region61: #{tpu_custom_call.1} parent=11 // pred_check
          %p492 = pneg %p329
        $region62: #{tpu_custom_call.1} parent=11 // pred_check_branch
          %494 = sbr.rel (%p492) target = $region64
        $region63: #{tpu_custom_call.1} parent=11 // pred_region
          _
        $region64: #{tpu_custom_call.1} parent=11 // pred_fallthru
          _
        // Predicated region
        $region65: #{tpu_custom_call.1} parent=11 // pred_check
          %p495 = pneg %p350
        $region66: #{tpu_custom_call.1} parent=11 // pred_check_branch
          %497 = sbr.rel (%p495) target = $region68
        $region67: #{tpu_custom_call.1} parent=11 // pred_region
          _
        $region68: #{tpu_custom_call.1} parent=11 // pred_fallthru
          _
        // Predicated region
        $region69: #{tpu_custom_call.1} parent=11 // pred_check
          %p498 = pneg %p371
        $region70: #{tpu_custom_call.1} parent=11 // pred_check_branch
          %500 = sbr.rel (%p498) target = $region72
        $region71: #{tpu_custom_call.1} parent=11 // pred_region
          _
        $region72: #{tpu_custom_call.1} parent=11 // pred_fallthru
          _
      $region12: #{tpu_custom_call.1} parent=5 // pred_fallthru
        _
      %p501 = scmp.lt.s32.totalorder %s30, 2
      // Predicated region
      $region73: #{tpu_custom_call.1} parent=5 // pred_check
        %p502 = pneg %p501
      $region74: #{tpu_custom_call.1} parent=5 // pred_check_branch
        %504 = sbr.rel (%p502) target = $region76
      $region75: #{tpu_custom_call.1} parent=5 // pred_region
        // Predicated region
        $region77: #{tpu_custom_call.1} parent=75 // pred_check
          %p505 = pneg %p50
        $region78: #{tpu_custom_call.1} parent=75 // pred_check_branch
          %507 = sbr.rel (%p505) target = $region80
        $region79: #{tpu_custom_call.1} parent=75 // pred_region
          %s508 = sand.u32 %s40, 1
          %s509 = scalar_lea.sflag [#allocation3], %s508
          %s510 = sand.u32 %s40, 1
          %s511 = smul.addr %s510, 24
          %s512 = scalar_lea.vmem [#allocation2], %s511
          %s513 = smul.u32 3, %s30
          %515 = vsyncadd %s509, 0
          %s516 = smul.addr %s513, 8
          %s517 = scalar_lea.hbm %s0, %s516
          %s518 = sshll.u32 %s517, 4
          %s519 = int_to_ptr.hbm [resolvable:$true] %s518
          %s520 = sshll.u32 %s512, 4
          %s521 = int_to_ptr.vmem [resolvable:$true] %s520
          %526 = dma.hbm_to_vmem [thread:$0]  %s519, 384, %s521, %s509, 128, 128, 8
        $region80: #{tpu_custom_call.1} parent=75 // pred_fallthru
          _
      $region76: #{tpu_custom_call.1} parent=5 // pred_fallthru
        _
      %p527 = scmp.le.s32.totalorder 1, %s30
      %p528 = scmp.lt.s32.totalorder %s30, 3
      %p529 = pnand %p527, %p528
      %p530 = pneg %p529
      // Predicated region
      $region81: #{tpu_custom_call.1} parent=5 // pred_check
        _
      $region82: #{tpu_custom_call.1} parent=5 // pred_check_branch
        %532 = sbr.rel (%p529) target = $region84
      $region83: #{tpu_custom_call.1} parent=5 // pred_region
        %s533 = ssub.s32 %s30, 1
        %s534 = sand.u32 %s43, 1
        %s535 = scalar_lea.sflag [#allocation3], %s534
        %s536 = sand.u32 %s43, 1
        %s537 = smul.addr %s536, 24
        %s538 = scalar_lea.vmem [#allocation2], %s537
        // Predicated region
        $region85: #{tpu_custom_call.1} parent=83 // pred_check
          %p539 = pneg %p56
        $region86: #{tpu_custom_call.1} parent=83 // pred_check_branch
          %541 = sbr.rel (%p539) target = $region88
        $region87: #{tpu_custom_call.1} parent=83 // pred_region
          %543 = dma.done %s535, 384
        $region88: #{tpu_custom_call.1} parent=83 // pred_fallthru
          _
        // Predicated region
        $region89: #{tpu_custom_call.1} parent=83 // pred_check
          %p544 = pneg %p140
        $region90: #{tpu_custom_call.1} parent=83 // pred_check_branch
          %546 = sbr.rel (%p544) target = $region92
        $region91: #{tpu_custom_call.1} parent=83 // pred_region
          %548 = dma.done [#allocation6], 3072
        $region92: #{tpu_custom_call.1} parent=83 // pred_fallthru
          _
        // Predicated region
        $region93: #{tpu_custom_call.1} parent=83 // pred_check
          %p549 = pneg %p182
        $region94: #{tpu_custom_call.1} parent=83 // pred_check_branch
          %551 = sbr.rel (%p549) target = $region96
        $region95: #{tpu_custom_call.1} parent=83 // pred_region
          %553 = dma.done [#allocation6], 1024
        $region96: #{tpu_custom_call.1} parent=83 // pred_fallthru
          _
        // Predicated region
        $region97: #{tpu_custom_call.1} parent=83 // pred_check
          %p554 = pneg %p266
        $region98: #{tpu_custom_call.1} parent=83 // pred_check_branch
          %556 = sbr.rel (%p554) target = $region100
        $region99: #{tpu_custom_call.1} parent=83 // pred_region
          %558 = dma.done [#allocation9], 1024
        $region100: #{tpu_custom_call.1} parent=83 // pred_fallthru
          _
        // Predicated region
        $region101: #{tpu_custom_call.1} parent=83 // pred_check
          %p559 = pneg %p308
        $region102: #{tpu_custom_call.1} parent=83 // pred_check_branch
          %561 = sbr.rel (%p559) target = $region104
        $region103: #{tpu_custom_call.1} parent=83 // pred_region
          %563 = dma.done [#allocation9], 1024
        $region104: #{tpu_custom_call.1} parent=83 // pred_fallthru
          _
        %s564 = sand.u32 %s43, 1
        %s565 = scalar_lea.sflag [#allocation3], %s564
        %s566 = sand.u32 %s43, 1
        %s567 = smul.addr %s566, 24
        %s568 = scalar_lea.vmem [#allocation2], %s567
        %p569 = pneg %p56
        %p570 = pneg %p53
        %p571 = pneg %p77
        %p572 = pneg %p74
        %p573 = pneg %p98
        %p574 = pneg %p95
        %p575 = pneg %p119
        %p576 = pneg %p116
        %p577 = pneg %p140
        %p578 = pneg %p137
        %p579 = pneg %p161
        %p580 = pneg %p158
        %p581 = pneg %p182
        %p582 = pneg %p179
        %p583 = pneg %p203
        %p584 = pneg %p200
        %p585 = pneg %p224
        %p586 = pneg %p221
        %p587 = pneg %p245
        %p588 = pneg %p242
        %p589 = pneg %p266
        %p590 = pneg %p263
        %p591 = pneg %p287
        %p592 = pneg %p284
        %p593 = pneg %p308
        %p594 = pneg %p305
        %p595 = pneg %p329
        %p596 = pneg %p326
        %p597 = pneg %p350
        %p598 = pneg %p347
        %p599 = pneg %p371
        %p600 = pneg %p368
        %p601 = pneg %p397
        %p602 = pneg %p394
        %s603 = sand.u32 %s384, 1
        %s604 = scalar_lea.sflag [#allocation4], %s603
        %s605 = sand.u32 %s384, 1
        %s606 = smul.addr %s605, 24
        %s607 = scalar_lea.vmem [#allocation11], %s606
        %s608 = smul.u32 3, %s35
        %s609 = smul.u32 3, %s35
        %v610 = vld [vmem:[%s538] sm:$0xff]
        %v611 = vld [vmem:[%s538 + $0x8] sm:$0xff]
        %v612 = vld [vmem:[%s538 + $0x10] sm:$0xff]
        %v613 = vpack.c.bf16 %v611, %v610
        %v614 = vpack.c.bf16 %v612, %v612
        %v615 = vld [vmem:[#allocation5] sm:$0xff]
        %v616 = vld [vmem:[#allocation5 + $0x8] sm:$0xf]
        %v617 = vld [vmem:[#allocation5 + $0xc] sm:$0xff]
        %v618 = vld [vmem:[#allocation5 + $0x14] sm:$0xf]
        %v619 = vld [vmem:[#allocation5 + $0x18] sm:$0xff]
        %v620 = vld [vmem:[#allocation5 + $0x20] sm:$0xf]
        %v621 = vld [vmem:[#allocation5 + $0x24] sm:$0xff]
        %v622 = vld [vmem:[#allocation5 + $0x2c] sm:$0xf]
        %v623 = vld [vmem:[#allocation5 + $0x30] sm:$0xff]
        %v624 = vld [vmem:[#allocation5 + $0x38] sm:$0xf]
        %v625 = vld [vmem:[#allocation5 + $0x3c] sm:$0xff]
        %v626 = vld [vmem:[#allocation5 + $0x44] sm:$0xf]
        %v627 = vld [vmem:[#allocation5 + $0x48] sm:$0xff]
        %v628 = vld [vmem:[#allocation5 + $0x50] sm:$0xf]
        %v629 = vld [vmem:[#allocation5 + $0x54] sm:$0xff]
        %v630 = vld [vmem:[#allocation5 + $0x5c] sm:$0xf]
        %v631 = vld [vmem:[#allocation5 + $0x60] sm:$0xff]
        %v632 = vld [vmem:[#allocation5 + $0x68] sm:$0xf]
        %v633 = vld [vmem:[#allocation5 + $0x6c] sm:$0xff]
        %v634 = vld [vmem:[#allocation5 + $0x74] sm:$0xf]
        %v635 = vld [vmem:[#allocation5 + $0x78] sm:$0xff]
        %v636 = vld [vmem:[#allocation5 + $0x80] sm:$0xf]
        %v637 = vld [vmem:[#allocation5 + $0x84] sm:$0xff]
        %v638 = vld [vmem:[#allocation5 + $0x8c] sm:$0xf]
        %v639 = vld [vmem:[#allocation5 + $0x90] sm:$0xff]
        %v640 = vld [vmem:[#allocation5 + $0x98] sm:$0xf]
        %v641 = vld [vmem:[#allocation5 + $0x9c] sm:$0xff]
        %v642 = vld [vmem:[#allocation5 + $0xa4] sm:$0xf]
        %v643 = vld [vmem:[#allocation5 + $0xa8] sm:$0xff]
        %v644 = vld [vmem:[#allocation5 + $0xb0] sm:$0xf]
        %v645 = vld [vmem:[#allocation5 + $0xb4] sm:$0xff]
        %v646 = vld [vmem:[#allocation5 + $0xbc] sm:$0xf]
        %v647 = vld [vmem:[%s5] sm:$0x7]
        %v649 = vperm.slane %v647, 0
        %v650 = vperm.slane %v647, 1
        %v651 = vperm.slane %v647, 2
        %v687 = vunpack.c.l.b16 %v615
        %v688 = vunpack.c.h.b16 %v615
        %v689 = vunpack.c.l.b16 %v616
        %v690 = vunpack.c.l.b16 %v617
        %v691 = vunpack.c.h.b16 %v617
        %v692 = vunpack.c.l.b16 %v618
        %v693 = vunpack.c.l.b16 %v619
        %v694 = vunpack.c.h.b16 %v619
        %v695 = vunpack.c.l.b16 %v620
        %v696 = vunpack.c.l.b16 %v621
        %v697 = vunpack.c.h.b16 %v621
        %v698 = vunpack.c.l.b16 %v622
        %v699 = vunpack.c.l.b16 %v623
        %v700 = vunpack.c.h.b16 %v623
        %v701 = vunpack.c.l.b16 %v624
        %v702 = vunpack.c.l.b16 %v625
        %v703 = vunpack.c.h.b16 %v625
        %v704 = vunpack.c.l.b16 %v626
        %v705 = vunpack.c.l.b16 %v627
        %v706 = vunpack.c.h.b16 %v627
        %v707 = vunpack.c.l.b16 %v628
        %v708 = vunpack.c.l.b16 %v629
        %v709 = vunpack.c.h.b16 %v629
        %v710 = vunpack.c.l.b16 %v630
        %v711 = vunpack.c.l.b16 %v631
        %v712 = vunpack.c.h.b16 %v631
        %v713 = vunpack.c.l.b16 %v632
        %v714 = vunpack.c.l.b16 %v633
        %v715 = vunpack.c.h.b16 %v633
        %v716 = vunpack.c.l.b16 %v634
        %v717 = vunpack.c.l.b16 %v635
        %v718 = vunpack.c.h.b16 %v635
        %v719 = vunpack.c.l.b16 %v636
        %v720 = vunpack.c.l.b16 %v637
        %v721 = vunpack.c.h.b16 %v637
        %v722 = vunpack.c.l.b16 %v638
        %v723 = vunpack.c.l.b16 %v639
        %v724 = vunpack.c.h.b16 %v639
        %v725 = vunpack.c.l.b16 %v640
        %v726 = vunpack.c.l.b16 %v641
        %v727 = vunpack.c.h.b16 %v641
        %v728 = vunpack.c.l.b16 %v642
        %v729 = vunpack.c.l.b16 %v643
        %v730 = vunpack.c.h.b16 %v643
        %v731 = vunpack.c.l.b16 %v644
        %v732 = vunpack.c.l.b16 %v645
        %v733 = vunpack.c.h.b16 %v645
        %v734 = vunpack.c.l.b16 %v646
        %v735 = vpack.c.b16 %v690, %v687
        %v736 = vpack.c.b16 %v691, %v688
        %v737 = vpack.c.b16 %v692, %v689
        %v738 = vpack.c.b16 %v696, %v693
        %v739 = vpack.c.b16 %v697, %v694
        %v740 = vpack.c.b16 %v698, %v695
        %v741 = vpack.c.b16 %v702, %v699
        %v742 = vpack.c.b16 %v703, %v700
        %v743 = vpack.c.b16 %v704, %v701
        %v744 = vpack.c.b16 %v708, %v705
        %v745 = vpack.c.b16 %v709, %v706
        %v746 = vpack.c.b16 %v710, %v707
        %v747 = vpack.c.b16 %v714, %v711
        %v748 = vpack.c.b16 %v715, %v712
        %v749 = vpack.c.b16 %v716, %v713
        %v750 = vpack.c.b16 %v720, %v717
        %v751 = vpack.c.b16 %v721, %v718
        %v752 = vpack.c.b16 %v722, %v719
        %v753 = vpack.c.b16 %v726, %v723
        %v754 = vpack.c.b16 %v727, %v724
        %v755 = vpack.c.b16 %v728, %v725
        %v756 = vpack.c.b16 %v732, %v729
        %v757 = vpack.c.b16 %v733, %v730
        %v758 = vpack.c.b16 %v734, %v731
        %783 = vmatpush.bf16.msra.mxu0 %v756
        %784 = vmatpush.bf16.msra.mxu0 %v753
        %785 = vmatpush.bf16.msra.mxu0 %v750
        %786 = vmatpush.bf16.msra.mxu0 %v747
        %787 = vmatpush.bf16.msra.mxu0 %v744
        %788 = vmatpush.bf16.msra.mxu0 %v741
        %789 = vmatpush.bf16.msra.mxu0 %v738
        %790 = vmatpush.bf16.msra.mxu0 %v735
        %791 = vmatmul.bf16.gmra.mxu0 %v613
        %v792 = vpop.f32.mrf.mxu0
        %v793 = vadd.f32 %v649, %v792
        %v794 = vpop.f32.mrf.mxu0
        %v795 = vadd.f32 %v649, %v794
        %796 = vmatmul.bf16.gmra.mxu0 %v614
        %v797 = vpop.f32.mrf.mxu0
        %v798 = vadd.f32 %v649, %v797
        %v799 = vpop.f32.mrf.mxu0
        %800 = vdwg.mxu0
        %801 = vmatpush.bf16.msra.mxu0 %v757
        %802 = vmatpush.bf16.msra.mxu0 %v754
        %803 = vmatpush.bf16.msra.mxu0 %v751
        %804 = vmatpush.bf16.msra.mxu0 %v748
        %805 = vmatpush.bf16.msra.mxu0 %v745
        %806 = vmatpush.bf16.msra.mxu0 %v742
        %807 = vmatpush.bf16.msra.mxu0 %v739
        %808 = vmatpush.bf16.msra.mxu0 %v736
        %809 = vmatmul.bf16.gmra.mxu0 %v613
        %v810 = vpop.f32.mrf.mxu0
        %v811 = vadd.f32 %v650, %v810
        %v812 = vpop.f32.mrf.mxu0
        %v813 = vadd.f32 %v650, %v812
        %814 = vmatmul.bf16.gmra.mxu0 %v614
        %v815 = vpop.f32.mrf.mxu0
        %v816 = vadd.f32 %v650, %v815
        %v817 = vpop.f32.mrf.mxu0
        %818 = vdwg.mxu0
        %819 = vmatpush.bf16.msra.mxu0 %v758
        %820 = vmatpush.bf16.msra.mxu0 %v755
        %821 = vmatpush.bf16.msra.mxu0 %v752
        %822 = vmatpush.bf16.msra.mxu0 %v749
        %823 = vmatpush.bf16.msra.mxu0 %v746
        %824 = vmatpush.bf16.msra.mxu0 %v743
        %825 = vmatpush.bf16.msra.mxu0 %v740
        %826 = vmatpush.bf16.msra.mxu0 %v737
        %827 = vmatmul.bf16.gmra.mxu0 %v613
        %v828 = vpop.f32.mrf.mxu0
        %v829 = vadd.f32 %v651, %v828
        %v830 = vpop.f32.mrf.mxu0
        %v831 = vadd.f32 %v651, %v830
        %832 = vmatmul.bf16.gmra.mxu0 %v614
        %v833 = vpop.f32.mrf.mxu0
        %v834 = vadd.f32 %v651, %v833
        %v835 = vpop.f32.mrf.mxu0
        %836 = vdwg.mxu0
        %v837 = vpack.c.bf16 %v793, %v793
        %v838 = vpack.c.bf16 %v795, %v795
        %v839 = vpack.c.bf16 %v798, %v798
        %v840 = vld [vmem:[%s1] sm:$0xff]
        %v841 = vld [vmem:[%s1 + $0x8] sm:$0xff]
        %v842 = vld [vmem:[%s1 + $0x10] sm:$0xff]
        %v843 = vld [vmem:[%s1 + $0x18] sm:$0xff]
        %v844 = vld [vmem:[%s1 + $0x20] sm:$0xff]
        %v845 = vld [vmem:[%s1 + $0x28] sm:$0xff]
        %v846 = vld [vmem:[%s1 + $0x30] sm:$0xff]
        %v847 = vld [vmem:[%s1 + $0x38] sm:$0xff]
        %v848 = vld [vmem:[%s1 + $0x40] sm:$0xff]
        %v849 = vld [vmem:[%s1 + $0x48] sm:$0xff]
        %v850 = vld [vmem:[%s1 + $0x50] sm:$0xff]
        %v851 = vld [vmem:[%s1 + $0x58] sm:$0xff]
        %v852 = vld [vmem:[%s1 + $0x60] sm:$0xff]
        %v853 = vld [vmem:[%s1 + $0x68] sm:$0xff]
        %v854 = vld [vmem:[%s1 + $0x70] sm:$0xff]
        %v855 = vld [vmem:[%s1 + $0x78] sm:$0xff]
        %v856 = vmul.f32 %v811, %v840
        %v857 = vmul.f32 %v811, %v841
        %v858 = vmul.f32 %v811, %v842
        %v859 = vmul.f32 %v811, %v843
        %v860 = vmul.f32 %v811, %v844
        %v861 = vmul.f32 %v811, %v845
        %v862 = vmul.f32 %v811, %v846
        %v863 = vmul.f32 %v811, %v847
        %v864 = vmul.f32 %v811, %v848
        %v865 = vmul.f32 %v811, %v849
        %v866 = vmul.f32 %v811, %v850
        %v867 = vmul.f32 %v811, %v851
        %v868 = vmul.f32 %v811, %v852
        %v869 = vmul.f32 %v811, %v853
        %v870 = vmul.f32 %v811, %v854
        %v871 = vmul.f32 %v811, %v855
        %v872 = vmul.f32 %v813, %v840
        %v873 = vmul.f32 %v813, %v841
        %v874 = vmul.f32 %v813, %v842
        %v875 = vmul.f32 %v813, %v843
        %v876 = vmul.f32 %v813, %v844
        %v877 = vmul.f32 %v813, %v845
        %v878 = vmul.f32 %v813, %v846
        %v879 = vmul.f32 %v813, %v847
        %v880 = vmul.f32 %v813, %v848
        %v881 = vmul.f32 %v813, %v849
        %v882 = vmul.f32 %v813, %v850
        %v883 = vmul.f32 %v813, %v851
        %v884 = vmul.f32 %v813, %v852
        %v885 = vmul.f32 %v813, %v853
        %v886 = vmul.f32 %v813, %v854
        %v887 = vmul.f32 %v813, %v855
        %v888 = vmul.f32 %v816, %v840
        %v889 = vmul.f32 %v816, %v841
        %v890 = vmul.f32 %v816, %v842
        %v891 = vmul.f32 %v816, %v843
        %v892 = vmul.f32 %v816, %v844
        %v893 = vmul.f32 %v816, %v845
        %v894 = vmul.f32 %v816, %v846
        %v895 = vmul.f32 %v816, %v847
        %v896 = vmul.f32 %v816, %v848
        %v897 = vmul.f32 %v816, %v849
        %v898 = vmul.f32 %v816, %v850
        %v899 = vmul.f32 %v816, %v851
        %v900 = vmul.f32 %v816, %v852
        %v901 = vmul.f32 %v816, %v853
        %v902 = vmul.f32 %v816, %v854
        %v903 = vmul.f32 %v816, %v855
        %v904 = vpack.c.bf16 %v856, %v856
        %v905 = vpack.c.bf16 %v857, %v857
        %v906 = vpack.c.bf16 %v858, %v858
        %v907 = vpack.c.bf16 %v859, %v859
        %v908 = vpack.c.bf16 %v860, %v860
        %v909 = vpack.c.bf16 %v861, %v861
        %v910 = vpack.c.bf16 %v862, %v862
        %v911 = vpack.c.bf16 %v863, %v863
        %v912 = vpack.c.bf16 %v864, %v864
        %v913 = vpack.c.bf16 %v865, %v865
        %v914 = vpack.c.bf16 %v866, %v866
        %v915 = vpack.c.bf16 %v867, %v867
        %v916 = vpack.c.bf16 %v868, %v868
        %v917 = vpack.c.bf16 %v869, %v869
        %v918 = vpack.c.bf16 %v870, %v870
        %v919 = vpack.c.bf16 %v871, %v871
        %v920 = vpack.c.bf16 %v872, %v872
        %v921 = vpack.c.bf16 %v873, %v873
        %v922 = vpack.c.bf16 %v874, %v874
        %v923 = vpack.c.bf16 %v875, %v875
        %v924 = vpack.c.bf16 %v876, %v876
        %v925 = vpack.c.bf16 %v877, %v877
        %v926 = vpack.c.bf16 %v878, %v878
        %v927 = vpack.c.bf16 %v879, %v879
        %v928 = vpack.c.bf16 %v880, %v880
        %v929 = vpack.c.bf16 %v881, %v881
        %v930 = vpack.c.bf16 %v882, %v882
        %v931 = vpack.c.bf16 %v883, %v883
        %v932 = vpack.c.bf16 %v884, %v884
        %v933 = vpack.c.bf16 %v885, %v885
        %v934 = vpack.c.bf16 %v886, %v886
        %v935 = vpack.c.bf16 %v887, %v887
        %v936 = vpack.c.bf16 %v888, %v888
        %v937 = vpack.c.bf16 %v889, %v889
        %v938 = vpack.c.bf16 %v890, %v890
        %v939 = vpack.c.bf16 %v891, %v891
        %v940 = vpack.c.bf16 %v892, %v892
        %v941 = vpack.c.bf16 %v893, %v893
        %v942 = vpack.c.bf16 %v894, %v894
        %v943 = vpack.c.bf16 %v895, %v895
        %v944 = vpack.c.bf16 %v896, %v896
        %v945 = vpack.c.bf16 %v897, %v897
        %v946 = vpack.c.bf16 %v898, %v898
        %v947 = vpack.c.bf16 %v899, %v899
        %v948 = vpack.c.bf16 %v900, %v900
        %v949 = vpack.c.bf16 %v901, %v901
        %v950 = vpack.c.bf16 %v902, %v902
        %v951 = vpack.c.bf16 %v903, %v903
        %v952 = vmul.f32 %v829, %v840
        %v953 = vmul.f32 %v829, %v841
        %v954 = vmul.f32 %v829, %v842
        %v955 = vmul.f32 %v829, %v843
        %v956 = vmul.f32 %v829, %v844
        %v957 = vmul.f32 %v829, %v845
        %v958 = vmul.f32 %v829, %v846
        %v959 = vmul.f32 %v829, %v847
        %v960 = vmul.f32 %v829, %v848
        %v961 = vmul.f32 %v829, %v849
        %v962 = vmul.f32 %v829, %v850
        %v963 = vmul.f32 %v829, %v851
        %v964 = vmul.f32 %v829, %v852
        %v965 = vmul.f32 %v829, %v853
        %v966 = vmul.f32 %v829, %v854
        %v967 = vmul.f32 %v829, %v855
        %v968 = vmul.f32 %v831, %v840
        %v969 = vmul.f32 %v831, %v841
        %v970 = vmul.f32 %v831, %v842
        %v971 = vmul.f32 %v831, %v843
        %v972 = vmul.f32 %v831, %v844
        %v973 = vmul.f32 %v831, %v845
        %v974 = vmul.f32 %v831, %v846
        %v975 = vmul.f32 %v831, %v847
        %v976 = vmul.f32 %v831, %v848
        %v977 = vmul.f32 %v831, %v849
        %v978 = vmul.f32 %v831, %v850
        %v979 = vmul.f32 %v831, %v851
        %v980 = vmul.f32 %v831, %v852
        %v981 = vmul.f32 %v831, %v853
        %v982 = vmul.f32 %v831, %v854
        %v983 = vmul.f32 %v831, %v855
        %v984 = vmul.f32 %v834, %v840
        %v985 = vmul.f32 %v834, %v841
        %v986 = vmul.f32 %v834, %v842
        %v987 = vmul.f32 %v834, %v843
        %v988 = vmul.f32 %v834, %v844
        %v989 = vmul.f32 %v834, %v845
        %v990 = vmul.f32 %v834, %v846
        %v991 = vmul.f32 %v834, %v847
        %v992 = vmul.f32 %v834, %v848
        %v993 = vmul.f32 %v834, %v849
        %v994 = vmul.f32 %v834, %v850
        %v995 = vmul.f32 %v834, %v851
        %v996 = vmul.f32 %v834, %v852
        %v997 = vmul.f32 %v834, %v853
        %v998 = vmul.f32 %v834, %v854
        %v999 = vmul.f32 %v834, %v855
        %v1000 = vpack.c.bf16 %v952, %v952
        %v1001 = vpack.c.bf16 %v953, %v953
        %v1002 = vpack.c.bf16 %v954, %v954
        %v1003 = vpack.c.bf16 %v955, %v955
        %v1004 = vpack.c.bf16 %v956, %v956
        %v1005 = vpack.c.bf16 %v957, %v957
        %v1006 = vpack.c.bf16 %v958, %v958
        %v1007 = vpack.c.bf16 %v959, %v959
        %v1008 = vpack.c.bf16 %v960, %v960
        %v1009 = vpack.c.bf16 %v961, %v961
        %v1010 = vpack.c.bf16 %v962, %v962
        %v1011 = vpack.c.bf16 %v963, %v963
        %v1012 = vpack.c.bf16 %v964, %v964
        %v1013 = vpack.c.bf16 %v965, %v965
        %v1014 = vpack.c.bf16 %v966, %v966
        %v1015 = vpack.c.bf16 %v967, %v967
        %v1016 = vpack.c.bf16 %v968, %v968
        %v1017 = vpack.c.bf16 %v969, %v969
        %v1018 = vpack.c.bf16 %v970, %v970
        %v1019 = vpack.c.bf16 %v971, %v971
        %v1020 = vpack.c.bf16 %v972, %v972
        %v1021 = vpack.c.bf16 %v973, %v973
        %v1022 = vpack.c.bf16 %v974, %v974
        %v1023 = vpack.c.bf16 %v975, %v975
        %v1024 = vpack.c.bf16 %v976, %v976
        %v1025 = vpack.c.bf16 %v977, %v977
        %v1026 = vpack.c.bf16 %v978, %v978
        %v1027 = vpack.c.bf16 %v979, %v979
        %v1028 = vpack.c.bf16 %v980, %v980
        %v1029 = vpack.c.bf16 %v981, %v981
        %v1030 = vpack.c.bf16 %v982, %v982
        %v1031 = vpack.c.bf16 %v983, %v983
        %v1032 = vpack.c.bf16 %v984, %v984
        %v1033 = vpack.c.bf16 %v985, %v985
        %v1034 = vpack.c.bf16 %v986, %v986
        %v1035 = vpack.c.bf16 %v987, %v987
        %v1036 = vpack.c.bf16 %v988, %v988
        %v1037 = vpack.c.bf16 %v989, %v989
        %v1038 = vpack.c.bf16 %v990, %v990
        %v1039 = vpack.c.bf16 %v991, %v991
        %v1040 = vpack.c.bf16 %v992, %v992
        %v1041 = vpack.c.bf16 %v993, %v993
        %v1042 = vpack.c.bf16 %v994, %v994
        %v1043 = vpack.c.bf16 %v995, %v995
        %v1044 = vpack.c.bf16 %v996, %v996
        %v1045 = vpack.c.bf16 %v997, %v997
        %v1046 = vpack.c.bf16 %v998, %v998
        %v1047 = vpack.c.bf16 %v999, %v999
        %v1064 = vunpack.c.l.b16 %v904
        %v1065 = vunpack.c.l.b16 %v905
        %v1066 = vunpack.c.l.b16 %v906
        %v1067 = vunpack.c.l.b16 %v907
        %v1068 = vunpack.c.l.b16 %v908
        %v1069 = vunpack.c.l.b16 %v909
        %v1070 = vunpack.c.l.b16 %v910
        %v1071 = vunpack.c.l.b16 %v911
        %v1072 = vunpack.c.l.b16 %v912
        %v1073 = vunpack.c.l.b16 %v913
        %v1074 = vunpack.c.l.b16 %v914
        %v1075 = vunpack.c.l.b16 %v915
        %v1076 = vunpack.c.l.b16 %v916
        %v1077 = vunpack.c.l.b16 %v917
        %v1078 = vunpack.c.l.b16 %v918
        %v1079 = vunpack.c.l.b16 %v919
        %v1080 = vpack.c.b16 %v1065, %v1064
        %v1081 = vpack.c.b16 %v1067, %v1066
        %v1082 = vpack.c.b16 %v1069, %v1068
        %v1083 = vpack.c.b16 %v1071, %v1070
        %v1084 = vpack.c.b16 %v1073, %v1072
        %v1085 = vpack.c.b16 %v1075, %v1074
        %v1086 = vpack.c.b16 %v1077, %v1076
        %v1087 = vpack.c.b16 %v1079, %v1078
        %1096 = vmatpush.bf16.xpose.msra.mxu0 %v1087
        %1097 = vmatpush.bf16.xpose.msra.mxu0 %v1086
        %1098 = vmatpush.bf16.xpose.msra.mxu0 %v1085
        %1099 = vmatpush.bf16.xpose.msra.mxu0 %v1084
        %1100 = vmatpush.bf16.xpose.msra.mxu0 %v1083
        %1101 = vmatpush.bf16.xpose.msra.mxu0 %v1082
        %1102 = vmatpush.bf16.xpose.msra.mxu0 %v1081
        %1103 = vmatpush.bf16.xpose.msra.mxu0 %v1080
        %1104 = vmatmul.bf16.gmra.mxu0 %v837
        %v1105 = vpop.f32.mrf.mxu0
        %v1106 = vadd.f32 0.0, %v1105
        %v1107 = vpop.f32.mrf.mxu0
        %1108 = vdwg.mxu0
        %v1125 = vunpack.c.l.b16 %v920
        %v1126 = vunpack.c.l.b16 %v921
        %v1127 = vunpack.c.l.b16 %v922
        %v1128 = vunpack.c.l.b16 %v923
        %v1129 = vunpack.c.l.b16 %v924
        %v1130 = vunpack.c.l.b16 %v925
        %v1131 = vunpack.c.l.b16 %v926
        %v1132 = vunpack.c.l.b16 %v927
        %v1133 = vunpack.c.l.b16 %v928
        %v1134 = vunpack.c.l.b16 %v929
        %v1135 = vunpack.c.l.b16 %v930
        %v1136 = vunpack.c.l.b16 %v931
        %v1137 = vunpack.c.l.b16 %v932
        %v1138 = vunpack.c.l.b16 %v933
        %v1139 = vunpack.c.l.b16 %v934
        %v1140 = vunpack.c.l.b16 %v935
        %v1141 = vpack.c.b16 %v1126, %v1125
        %v1142 = vpack.c.b16 %v1128, %v1127
        %v1143 = vpack.c.b16 %v1130, %v1129
        %v1144 = vpack.c.b16 %v1132, %v1131
        %v1145 = vpack.c.b16 %v1134, %v1133
        %v1146 = vpack.c.b16 %v1136, %v1135
        %v1147 = vpack.c.b16 %v1138, %v1137
        %v1148 = vpack.c.b16 %v1140, %v1139
        %1157 = vmatpush.bf16.xpose.msra.mxu0 %v1148
        %1158 = vmatpush.bf16.xpose.msra.mxu0 %v1147
        %1159 = vmatpush.bf16.xpose.msra.mxu0 %v1146
        %1160 = vmatpush.bf16.xpose.msra.mxu0 %v1145
        %1161 = vmatpush.bf16.xpose.msra.mxu0 %v1144
        %1162 = vmatpush.bf16.xpose.msra.mxu0 %v1143
        %1163 = vmatpush.bf16.xpose.msra.mxu0 %v1142
        %1164 = vmatpush.bf16.xpose.msra.mxu0 %v1141
        %1165 = vmatmul.bf16.gmra.mxu0 %v838
        %v1166 = vpop.f32.mrf.mxu0
        %v1167 = vadd.f32 0.0, %v1166
        %v1168 = vpop.f32.mrf.mxu0
        %1169 = vdwg.mxu0
        %v1186 = vunpack.c.l.b16 %v936
        %v1187 = vunpack.c.l.b16 %v937
        %v1188 = vunpack.c.l.b16 %v938
        %v1189 = vunpack.c.l.b16 %v939
        %v1190 = vunpack.c.l.b16 %v940
        %v1191 = vunpack.c.l.b16 %v941
        %v1192 = vunpack.c.l.b16 %v942
        %v1193 = vunpack.c.l.b16 %v943
        %v1194 = vunpack.c.l.b16 %v944
        %v1195 = vunpack.c.l.b16 %v945
        %v1196 = vunpack.c.l.b16 %v946
        %v1197 = vunpack.c.l.b16 %v947
        %v1198 = vunpack.c.l.b16 %v948
        %v1199 = vunpack.c.l.b16 %v949
        %v1200 = vunpack.c.l.b16 %v950
        %v1201 = vunpack.c.l.b16 %v951
        %v1202 = vpack.c.b16 %v1187, %v1186
        %v1203 = vpack.c.b16 %v1189, %v1188
        %v1204 = vpack.c.b16 %v1191, %v1190
        %v1205 = vpack.c.b16 %v1193, %v1192
        %v1206 = vpack.c.b16 %v1195, %v1194
        %v1207 = vpack.c.b16 %v1197, %v1196
        %v1208 = vpack.c.b16 %v1199, %v1198
        %v1209 = vpack.c.b16 %v1201, %v1200
        %1218 = vmatpush.bf16.xpose.msra.mxu0 %v1209
        %1219 = vmatpush.bf16.xpose.msra.mxu0 %v1208
        %1220 = vmatpush.bf16.xpose.msra.mxu0 %v1207
        %1221 = vmatpush.bf16.xpose.msra.mxu0 %v1206
        %1222 = vmatpush.bf16.xpose.msra.mxu0 %v1205
        %1223 = vmatpush.bf16.xpose.msra.mxu0 %v1204
        %1224 = vmatpush.bf16.xpose.msra.mxu0 %v1203
        %1225 = vmatpush.bf16.xpose.msra.mxu0 %v1202
        %1226 = vmatmul.bf16.gmra.mxu0 %v839
        %v1227 = vpop.f32.mrf.mxu0
        %v1228 = vadd.f32 0.0, %v1227
        %v1229 = vpop.f32.mrf.mxu0
        %1230 = vdwg.mxu0
        %1231 = vmax.xlane.f32.xlu0 %v1106
        %v1232 = vpop.xlane.xlu0 %1231
        %1233 = vmax.xlane.f32.xlu0 %v1167
        %v1234 = vpop.xlane.xlu0 %1233
        %1235 = vmax.xlane.f32.xlu0 %v1228
        %v1236 = vpop.xlane.xlu0 %1235
        %v1237 = vsub.f32 %v1106, %v1232
        %v1238 = vsub.f32 %v1167, %v1234
        %v1239 = vsub.f32 %v1228, %v1236
        %v1240 = vmul.f32 %v1237, 1.442695
        %v1241 = vpow.pop %v1240
        %v1242 = vmul.f32 %v1238, 1.442695
        %v1243 = vpow.pop %v1242
        %v1244 = vmul.f32 %v1239, 1.442695
        %v1245 = vpow.pop %v1244
        %v1246 = vld [vmem:[%s2] sm:$0xff]
        %v1247 = vld [vmem:[%s2 + $0x8] sm:$0xff]
        %v1248 = vld [vmem:[%s2 + $0x10] sm:$0xff]
        %v1249 = vld [vmem:[%s2 + $0x18] sm:$0xff]
        %v1250 = vld [vmem:[%s2 + $0x20] sm:$0xff]
        %v1251 = vld [vmem:[%s2 + $0x28] sm:$0xff]
        %v1252 = vld [vmem:[%s2 + $0x30] sm:$0xff]
        %v1253 = vld [vmem:[%s2 + $0x38] sm:$0xff]
        %v1254 = vld [vmem:[%s2 + $0x40] sm:$0xff]
        %v1255 = vld [vmem:[%s2 + $0x48] sm:$0xff]
        %v1256 = vld [vmem:[%s2 + $0x50] sm:$0xff]
        %v1257 = vld [vmem:[%s2 + $0x58] sm:$0xff]
        %v1258 = vld [vmem:[%s2 + $0x60] sm:$0xff]
        %v1259 = vld [vmem:[%s2 + $0x68] sm:$0xff]
        %v1260 = vld [vmem:[%s2 + $0x70] sm:$0xff]
        %v1261 = vld [vmem:[%s2 + $0x78] sm:$0xff]
        %1262 = vmatpush.msra.mxu0 %v1261
        %1263 = vmatpush.msra.mxu0 %v1260
        %1264 = vmatpush.msra.mxu0 %v1259
        %1265 = vmatpush.msra.mxu0 %v1258
        %1266 = vmatpush.msra.mxu0 %v1257
        %1267 = vmatpush.msra.mxu0 %v1256
        %1268 = vmatpush.msra.mxu0 %v1255
        %1269 = vmatpush.msra.mxu0 %v1254
        %1270 = vmatpush.msra.mxu0 %v1253
        %1271 = vmatpush.msra.mxu0 %v1252
        %1272 = vmatpush.msra.mxu0 %v1251
        %1273 = vmatpush.msra.mxu0 %v1250
        %1274 = vmatpush.msra.mxu0 %v1249
        %1275 = vmatpush.msra.mxu0 %v1248
        %1276 = vmatpush.msra.mxu0 %v1247
        %1277 = vmatpush.msra.mxu0 %v1246
        %1278 = vmatmul.f32.gmra.mxu0 %v1241
        %v1279 = vpop.f32.mrf.mxu0
        %v1280 = vadd.f32 0.0, %v1279
        %1281 = vmatmul.f32.gmra.mxu0 %v1243
        %v1282 = vpop.f32.mrf.mxu0
        %v1283 = vadd.f32 0.0, %v1282
        %1284 = vmatmul.f32.gmra.mxu0 %v1245
        %v1285 = vpop.f32.mrf.mxu0
        %v1286 = vadd.f32 0.0, %v1285
        %1287 = vdwg.mxu0
        %v1288 = vrcp.pop %v1280
        %v1289 = vrcp.pop %v1283
        %v1290 = vrcp.pop %v1286
        %v1291 = vmul.f32 %v1280, %v1288
        %v1292 = vmul.f32 %v1283, %v1289
        %v1293 = vmul.f32 %v1286, %v1290
        %v1294 = vsub.f32 2.0, %v1291
        %v1295 = vsub.f32 2.0, %v1292
        %v1296 = vsub.f32 2.0, %v1293
        %v1297 = vmul.f32 %v1288, %v1294
        %v1298 = vmul.f32 %v1289, %v1295
        %v1299 = vmul.f32 %v1290, %v1296
        %v1300 = vld [vmem:[%s3] sm:$0xff]
        %v1301 = vld [vmem:[%s3 + $0x8] sm:$0xff]
        %vm1302 = vcmask 130048
        %v1304 = vsel %vm1302, %v1297, 0
        %v1307 = vsel %vm1302, %v1298, 0
        %v1310 = vsel %vm1302, %v1299, 0
        %1312 = vmatpush.msra.mxu0 0.0
        %1313 = vmatpush.msra.mxu0 0.0
        %1314 = vmatpush.msra.mxu0 0.0
        %1315 = vmatpush.msra.mxu0 0.0
        %1316 = vmatpush.msra.mxu0 0.0
        %1317 = vmatpush.msra.mxu0 0.0
        %1318 = vmatpush.msra.mxu0 0.0
        %1319 = vmatpush.msra.mxu0 0.0
        %1320 = vmatpush.msra.mxu0 0.0
        %1321 = vmatpush.msra.mxu0 0.0
        %1322 = vmatpush.msra.mxu0 0.0
        %1323 = vmatpush.msra.mxu0 0.0
        %1324 = vmatpush.msra.mxu0 0.0
        %1325 = vmatpush.msra.mxu0 0.0
        %1326 = vmatpush.msra.mxu0 %v1301
        %1327 = vmatpush.msra.mxu0 %v1300
        %1328 = vmatmul.f32.gmra.mxu0 %v1304
        %v1329 = vpop.f32.mrf.mxu0
        %v1330 = vadd.f32 0.0, %v1329
        %1331 = vmatmul.f32.gmra.mxu0 %v1307
        %v1332 = vpop.f32.mrf.mxu0
        %v1333 = vadd.f32 0.0, %v1332
        %1334 = vmatmul.f32.gmra.mxu0 %v1310
        %v1335 = vpop.f32.mrf.mxu0
        %v1336 = vadd.f32 0.0, %v1335
        %1337 = vdwg.mxu0
        %v1338 = vmul.f32 %v1241, %v1330
        %v1339 = vmul.f32 %v1243, %v1333
        %v1340 = vmul.f32 %v1245, %v1336
        %v1341 = vpack.c.bf16 %v1338, %v1338
        %v1342 = vpack.c.bf16 %v1339, %v1339
        %v1343 = vpack.c.bf16 %v1340, %v1340
        %v1360 = vunpack.c.l.b16 %v1000
        %v1361 = vunpack.c.l.b16 %v1001
        %v1362 = vunpack.c.l.b16 %v1002
        %v1363 = vunpack.c.l.b16 %v1003
        %v1364 = vunpack.c.l.b16 %v1004
        %v1365 = vunpack.c.l.b16 %v1005
        %v1366 = vunpack.c.l.b16 %v1006
        %v1367 = vunpack.c.l.b16 %v1007
        %v1368 = vunpack.c.l.b16 %v1008
        %v1369 = vunpack.c.l.b16 %v1009
        %v1370 = vunpack.c.l.b16 %v1010
        %v1371 = vunpack.c.l.b16 %v1011
        %v1372 = vunpack.c.l.b16 %v1012
        %v1373 = vunpack.c.l.b16 %v1013
        %v1374 = vunpack.c.l.b16 %v1014
        %v1375 = vunpack.c.l.b16 %v1015
        %v1376 = vpack.c.b16 %v1361, %v1360
        %v1377 = vpack.c.b16 %v1363, %v1362
        %v1378 = vpack.c.b16 %v1365, %v1364
        %v1379 = vpack.c.b16 %v1367, %v1366
        %v1380 = vpack.c.b16 %v1369, %v1368
        %v1381 = vpack.c.b16 %v1371, %v1370
        %v1382 = vpack.c.b16 %v1373, %v1372
        %v1383 = vpack.c.b16 %v1375, %v1374
        %1392 = vmatpush.bf16.msra.mxu0 %v1383
        %1393 = vmatpush.bf16.msra.mxu0 %v1382
        %1394 = vmatpush.bf16.msra.mxu0 %v1381
        %1395 = vmatpush.bf16.msra.mxu0 %v1380
        %1396 = vmatpush.bf16.msra.mxu0 %v1379
        %1397 = vmatpush.bf16.msra.mxu0 %v1378
        %1398 = vmatpush.bf16.msra.mxu0 %v1377
        %1399 = vmatpush.bf16.msra.mxu0 %v1376
        %1400 = vmatmul.bf16.gmra.mxu0 %v1341
        %v1401 = vpop.f32.mrf.mxu0
        %v1402 = vadd.f32 0.0, %v1401
        %v1403 = vpop.f32.mrf.mxu0
        %1404 = vdwg.mxu0
        %v1421 = vunpack.c.l.b16 %v1016
        %v1422 = vunpack.c.l.b16 %v1017
        %v1423 = vunpack.c.l.b16 %v1018
        %v1424 = vunpack.c.l.b16 %v1019
        %v1425 = vunpack.c.l.b16 %v1020
        %v1426 = vunpack.c.l.b16 %v1021
        %v1427 = vunpack.c.l.b16 %v1022
        %v1428 = vunpack.c.l.b16 %v1023
        %v1429 = vunpack.c.l.b16 %v1024
        %v1430 = vunpack.c.l.b16 %v1025
        %v1431 = vunpack.c.l.b16 %v1026
        %v1432 = vunpack.c.l.b16 %v1027
        %v1433 = vunpack.c.l.b16 %v1028
        %v1434 = vunpack.c.l.b16 %v1029
        %v1435 = vunpack.c.l.b16 %v1030
        %v1436 = vunpack.c.l.b16 %v1031
        %v1437 = vpack.c.b16 %v1422, %v1421
        %v1438 = vpack.c.b16 %v1424, %v1423
        %v1439 = vpack.c.b16 %v1426, %v1425
        %v1440 = vpack.c.b16 %v1428, %v1427
        %v1441 = vpack.c.b16 %v1430, %v1429
        %v1442 = vpack.c.b16 %v1432, %v1431
        %v1443 = vpack.c.b16 %v1434, %v1433
        %v1444 = vpack.c.b16 %v1436, %v1435
        %1453 = vmatpush.bf16.msra.mxu0 %v1444
        %1454 = vmatpush.bf16.msra.mxu0 %v1443
        %1455 = vmatpush.bf16.msra.mxu0 %v1442
        %1456 = vmatpush.bf16.msra.mxu0 %v1441
        %1457 = vmatpush.bf16.msra.mxu0 %v1440
        %1458 = vmatpush.bf16.msra.mxu0 %v1439
        %1459 = vmatpush.bf16.msra.mxu0 %v1438
        %1460 = vmatpush.bf16.msra.mxu0 %v1437
        %1461 = vmatmul.bf16.gmra.mxu0 %v1342
        %v1462 = vpop.f32.mrf.mxu0
        %v1463 = vadd.f32 0.0, %v1462
        %v1464 = vpop.f32.mrf.mxu0
        %1465 = vdwg.mxu0
        %v1482 = vunpack.c.l.b16 %v1032
        %v1483 = vunpack.c.l.b16 %v1033
        %v1484 = vunpack.c.l.b16 %v1034
        %v1485 = vunpack.c.l.b16 %v1035
        %v1486 = vunpack.c.l.b16 %v1036
        %v1487 = vunpack.c.l.b16 %v1037
        %v1488 = vunpack.c.l.b16 %v1038
        %v1489 = vunpack.c.l.b16 %v1039
        %v1490 = vunpack.c.l.b16 %v1040
        %v1491 = vunpack.c.l.b16 %v1041
        %v1492 = vunpack.c.l.b16 %v1042
        %v1493 = vunpack.c.l.b16 %v1043
        %v1494 = vunpack.c.l.b16 %v1044
        %v1495 = vunpack.c.l.b16 %v1045
        %v1496 = vunpack.c.l.b16 %v1046
        %v1497 = vunpack.c.l.b16 %v1047
        %v1498 = vpack.c.b16 %v1483, %v1482
        %v1499 = vpack.c.b16 %v1485, %v1484
        %v1500 = vpack.c.b16 %v1487, %v1486
        %v1501 = vpack.c.b16 %v1489, %v1488
        %v1502 = vpack.c.b16 %v1491, %v1490
        %v1503 = vpack.c.b16 %v1493, %v1492
        %v1504 = vpack.c.b16 %v1495, %v1494
        %v1505 = vpack.c.b16 %v1497, %v1496
        %1514 = vmatpush.bf16.msra.mxu0 %v1505
        %1515 = vmatpush.bf16.msra.mxu0 %v1504
        %1516 = vmatpush.bf16.msra.mxu0 %v1503
        %1517 = vmatpush.bf16.msra.mxu0 %v1502
        %1518 = vmatpush.bf16.msra.mxu0 %v1501
        %1519 = vmatpush.bf16.msra.mxu0 %v1500
        %1520 = vmatpush.bf16.msra.mxu0 %v1499
        %1521 = vmatpush.bf16.msra.mxu0 %v1498
        %1522 = vmatmul.bf16.gmra.mxu0 %v1343
        %v1523 = vpop.f32.mrf.mxu0
        %v1524 = vadd.f32 0.0, %v1523
        %v1525 = vpop.f32.mrf.mxu0
        %1526 = vdwg.mxu0
        %v1527 = vpack.c.bf16 %v1463, %v1402
        %v1528 = vpack.c.bf16 %v1524, %v1524
        %v1529 = vld [vmem:[#allocation7] sm:$0xf]
        %v1530 = vld [vmem:[#allocation7 + $0x4] sm:$0xf]
        %v1531 = vld [vmem:[#allocation7 + $0x8] sm:$0xf]
        %v1532 = vld [vmem:[#allocation7 + $0xc] sm:$0xf]
        %v1533 = vld [vmem:[#allocation7 + $0x10] sm:$0xf]
        %v1534 = vld [vmem:[#allocation7 + $0x14] sm:$0xf]
        %v1535 = vld [vmem:[#allocation7 + $0x18] sm:$0xf]
        %v1536 = vld [vmem:[#allocation7 + $0x1c] sm:$0xf]
        %v1537 = vld [vmem:[#allocation7 + $0x20] sm:$0xf]
        %v1538 = vld [vmem:[#allocation7 + $0x24] sm:$0xf]
        %v1539 = vld [vmem:[#allocation7 + $0x28] sm:$0xf]
        %v1540 = vld [vmem:[#allocation7 + $0x2c] sm:$0xf]
        %v1541 = vld [vmem:[#allocation7 + $0x30] sm:$0xf]
        %v1542 = vld [vmem:[#allocation7 + $0x34] sm:$0xf]
        %v1543 = vld [vmem:[#allocation7 + $0x38] sm:$0xf]
        %v1544 = vld [vmem:[#allocation7 + $0x3c] sm:$0xf]
        %v1545 = vld [vmem:[%s7] sm:$0x1]
        %v1547 = vperm.slane %v1545, 0
        %v1565 = vunpack.c.l.b16 %v1529
        %v1566 = vunpack.c.l.b16 %v1530
        %v1567 = vunpack.c.l.b16 %v1531
        %v1568 = vunpack.c.l.b16 %v1532
        %v1569 = vunpack.c.l.b16 %v1533
        %v1570 = vunpack.c.l.b16 %v1534
        %v1571 = vunpack.c.l.b16 %v1535
        %v1572 = vunpack.c.l.b16 %v1536
        %v1573 = vunpack.c.l.b16 %v1537
        %v1574 = vunpack.c.l.b16 %v1538
        %v1575 = vunpack.c.l.b16 %v1539
        %v1576 = vunpack.c.l.b16 %v1540
        %v1577 = vunpack.c.l.b16 %v1541
        %v1578 = vunpack.c.l.b16 %v1542
        %v1579 = vunpack.c.l.b16 %v1543
        %v1580 = vunpack.c.l.b16 %v1544
        %v1581 = vpack.c.b16 %v1566, %v1565
        %v1582 = vpack.c.b16 %v1568, %v1567
        %v1583 = vpack.c.b16 %v1570, %v1569
        %v1584 = vpack.c.b16 %v1572, %v1571
        %v1585 = vpack.c.b16 %v1574, %v1573
        %v1586 = vpack.c.b16 %v1576, %v1575
        %v1587 = vpack.c.b16 %v1578, %v1577
        %v1588 = vpack.c.b16 %v1580, %v1579
        %1597 = vmatpush.bf16.msra.mxu0 %v1588
        %1598 = vmatpush.bf16.msra.mxu0 %v1587
        %1599 = vmatpush.bf16.msra.mxu0 %v1586
        %1600 = vmatpush.bf16.msra.mxu0 %v1585
        %1601 = vmatpush.bf16.msra.mxu0 %v1584
        %1602 = vmatpush.bf16.msra.mxu0 %v1583
        %1603 = vmatpush.bf16.msra.mxu0 %v1582
        %1604 = vmatpush.bf16.msra.mxu0 %v1581
        %1605 = vmatmul.bf16.gmra.mxu0 %v1527
        %v1606 = vpop.f32.mrf.mxu0
        %v1607 = vadd.f32 %v1547, %v1606
        %v1608 = vpop.f32.mrf.mxu0
        %v1609 = vadd.f32 %v1547, %v1608
        %1610 = vmatmul.bf16.gmra.mxu0 %v1528
        %v1611 = vpop.f32.mrf.mxu0
        %v1612 = vadd.f32 %v1547, %v1611
        %v1613 = vpop.f32.mrf.mxu0
        %1614 = vdwg.mxu0
        %v1615 = vadd.f32 %v610, %v1607
        %v1616 = vadd.f32 %v611, %v1609
        %v1617 = vadd.f32 %v612, %v1612
        %v1618 = vld [vmem:[%s8] sm:$0x1]
        %v1619 = vld [vmem:[%s9] sm:$0x1]
        %1620 = vadd.xlane.f32.xlu0 %v1615
        %v1621 = vpop.xlane.xlu0 %1620
        %1622 = vadd.xlane.f32.xlu0 %v1616
        %v1623 = vpop.xlane.xlu0 %1622
        %1624 = vadd.xlane.f32.xlu0 %v1617
        %v1625 = vpop.xlane.xlu0 %1624
        %v1626 = vrcp.pop 128.0
        %v1627 = vmul.f32 128.0, %v1626
        %v1628 = vsub.f32 1.0, %v1627
        %v1629 = vmul.f32 %v1626, %v1628
        %v1630 = vadd.f32 %v1626, %v1629
        %vm1631 = vweird.f32 %v1626
        %v1632 = vsel %vm1631, %v1626, %v1630
        %v1633 = vmul.f32 %v1621, %v1632
        %v1634 = vmul.f32 %v1623, %v1632
        %v1635 = vmul.f32 %v1625, %v1632
        %v1636 = vsub.f32 %v1615, %v1633
        %v1637 = vsub.f32 %v1616, %v1634
        %v1638 = vsub.f32 %v1617, %v1635
        %v1639 = vmul.f32 %v1636, %v1636
        %v1640 = vmul.f32 %v1637, %v1637
        %v1641 = vmul.f32 %v1638, %v1638
        %1642 = vadd.xlane.f32.xlu0 %v1639
        %v1643 = vpop.xlane.xlu0 %1642
        %1644 = vadd.xlane.f32.xlu0 %v1640
        %v1645 = vpop.xlane.xlu0 %1644
        %1646 = vadd.xlane.f32.xlu0 %v1641
        %v1647 = vpop.xlane.xlu0 %1646
        %v1648 = vmul.f32 %v1643, %v1632
        %v1649 = vmul.f32 %v1645, %v1632
        %v1650 = vmul.f32 %v1647, %v1632
        %v1651 = vadd.f32 %v1648, 1e-05
        %v1652 = vadd.f32 %v1649, 1e-05
        %v1653 = vadd.f32 %v1650, 1e-05
        %v1654 = vrsqrt.pop %v1651
        %v1655 = vmul.f32 %v1654, %v1651
        %v1656 = vmul.f32 %v1655, %v1654
        %v1657 = vmul.f32 0.5, %v1656
        %v1658 = vsub.f32 1.5, %v1657
        %v1659 = vmul.f32 %v1654, %v1658
        %vm1660 = vweird.f32 %v1651
        %vm1661 = vweird.f32 %v1654
        %vm1662 = vmor %vm1660, %vm1661
        %v1663 = vsel %vm1662, %v1654, %v1659
        %v1664 = vrsqrt.pop %v1652
        %v1665 = vmul.f32 %v1664, %v1652
        %v1666 = vmul.f32 %v1665, %v1664
        %v1667 = vmul.f32 0.5, %v1666
        %v1668 = vsub.f32 1.5, %v1667
        %v1669 = vmul.f32 %v1664, %v1668
        %vm1670 = vweird.f32 %v1652
        %vm1671 = vweird.f32 %v1664
        %vm1672 = vmor %vm1670, %vm1671
        %v1673 = vsel %vm1672, %v1664, %v1669
        %v1674 = vrsqrt.pop %v1653
        %v1675 = vmul.f32 %v1674, %v1653
        %v1676 = vmul.f32 %v1675, %v1674
        %v1677 = vmul.f32 0.5, %v1676
        %v1678 = vsub.f32 1.5, %v1677
        %v1679 = vmul.f32 %v1674, %v1678
        %vm1680 = vweird.f32 %v1653
        %vm1681 = vweird.f32 %v1674
        %vm1682 = vmor %vm1680, %vm1681
        %v1683 = vsel %vm1682, %v1674, %v1679
        %v1684 = vmul.f32 %v1636, %v1663
        %v1685 = vmul.f32 %v1637, %v1673
        %v1686 = vmul.f32 %v1638, %v1683
        %v1688 = vperm.slane %v1618, 0
        %v1690 = vmul.f32 %v1684, %v1688
        %v1691 = vmul.f32 %v1685, %v1688
        %v1692 = vmul.f32 %v1686, %v1688
        %v1694 = vperm.slane %v1619, 0
        %v1696 = vadd.f32 %v1690, %v1694
        %v1697 = vadd.f32 %v1691, %v1694
        %v1698 = vadd.f32 %v1692, %v1694
        %v1699 = vpack.c.bf16 %v1697, %v1696
        %v1700 = vpack.c.bf16 %v1698, %v1698
        %v1701 = vld [vmem:[#allocation8] sm:$0xf]
        %v1702 = vld [vmem:[#allocation8 + $0x4] sm:$0xf]
        %v1703 = vld [vmem:[#allocation8 + $0x8] sm:$0xf]
        %v1704 = vld [vmem:[#allocation8 + $0xc] sm:$0xf]
        %v1705 = vld [vmem:[#allocation8 + $0x10] sm:$0xf]
        %v1706 = vld [vmem:[#allocation8 + $0x14] sm:$0xf]
        %v1707 = vld [vmem:[#allocation8 + $0x18] sm:$0xf]
        %v1708 = vld [vmem:[#allocation8 + $0x1c] sm:$0xf]
        %v1709 = vld [vmem:[#allocation8 + $0x20] sm:$0xf]
        %v1710 = vld [vmem:[#allocation8 + $0x24] sm:$0xf]
        %v1711 = vld [vmem:[#allocation8 + $0x28] sm:$0xf]
        %v1712 = vld [vmem:[#allocation8 + $0x2c] sm:$0xf]
        %v1713 = vld [vmem:[#allocation8 + $0x30] sm:$0xf]
        %v1714 = vld [vmem:[#allocation8 + $0x34] sm:$0xf]
        %v1715 = vld [vmem:[#allocation8 + $0x38] sm:$0xf]
        %v1716 = vld [vmem:[#allocation8 + $0x3c] sm:$0xf]
        %v1717 = vld [vmem:[%s11] sm:$0x1]
        %v1719 = vperm.slane %v1717, 0
        %v1737 = vunpack.c.l.b16 %v1701
        %v1738 = vunpack.c.l.b16 %v1702
        %v1739 = vunpack.c.l.b16 %v1703
        %v1740 = vunpack.c.l.b16 %v1704
        %v1741 = vunpack.c.l.b16 %v1705
        %v1742 = vunpack.c.l.b16 %v1706
        %v1743 = vunpack.c.l.b16 %v1707
        %v1744 = vunpack.c.l.b16 %v1708
        %v1745 = vunpack.c.l.b16 %v1709
        %v1746 = vunpack.c.l.b16 %v1710
        %v1747 = vunpack.c.l.b16 %v1711
        %v1748 = vunpack.c.l.b16 %v1712
        %v1749 = vunpack.c.l.b16 %v1713
        %v1750 = vunpack.c.l.b16 %v1714
        %v1751 = vunpack.c.l.b16 %v1715
        %v1752 = vunpack.c.l.b16 %v1716
        %v1753 = vpack.c.b16 %v1738, %v1737
        %v1754 = vpack.c.b16 %v1740, %v1739
        %v1755 = vpack.c.b16 %v1742, %v1741
        %v1756 = vpack.c.b16 %v1744, %v1743
        %v1757 = vpack.c.b16 %v1746, %v1745
        %v1758 = vpack.c.b16 %v1748, %v1747
        %v1759 = vpack.c.b16 %v1750, %v1749
        %v1760 = vpack.c.b16 %v1752, %v1751
        %1769 = vmatpush.bf16.msra.mxu0 %v1760
        %1770 = vmatpush.bf16.msra.mxu0 %v1759
        %1771 = vmatpush.bf16.msra.mxu0 %v1758
        %1772 = vmatpush.bf16.msra.mxu0 %v1757
        %1773 = vmatpush.bf16.msra.mxu0 %v1756
        %1774 = vmatpush.bf16.msra.mxu0 %v1755
        %1775 = vmatpush.bf16.msra.mxu0 %v1754
        %1776 = vmatpush.bf16.msra.mxu0 %v1753
        %1777 = vmatmul.bf16.gmra.mxu0 %v1699
        %v1778 = vpop.f32.mrf.mxu0
        %v1779 = vadd.f32 %v1719, %v1778
        %v1780 = vpop.f32.mrf.mxu0
        %v1781 = vadd.f32 %v1719, %v1780
        %1782 = vmatmul.bf16.gmra.mxu0 %v1700
        %v1783 = vpop.f32.mrf.mxu0
        %v1784 = vadd.f32 %v1719, %v1783
        %v1785 = vpop.f32.mrf.mxu0
        %1786 = vdwg.mxu0
        %v1787 = vmul.f32 %v1779, 0.5
        %v1788 = vmul.f32 %v1781, 0.5
        %v1789 = vmul.f32 %v1784, 0.5
        %v1790 = vmul.f32 %v1779, 0.70710677
        %v1791 = vmul.f32 %v1781, 0.70710677
        %v1792 = vmul.f32 %v1784, 0.70710677
        %v1793 = vand.u32 2147483647, %v1790
        %v1794 = vand.u32 2147483647, %v1791
        %v1795 = vand.u32 2147483647, %v1792
        %v1796 = vmul.f32 %v1793, 0.3275911
        %v1797 = vmul.f32 %v1794, 0.3275911
        %v1798 = vmul.f32 %v1795, 0.3275911
        %v1799 = vadd.f32 %v1796, 1.0
        %v1800 = vadd.f32 %v1797, 1.0
        %v1801 = vadd.f32 %v1798, 1.0
        %v1802 = vrcp.pop %v1799
        %v1803 = vmul.f32 %v1799, %v1802
        %v1804 = vsub.f32 1.0, %v1803
        %v1805 = vmul.f32 %v1802, %v1804
        %v1806 = vadd.f32 %v1802, %v1805
        %vm1807 = vweird.f32 %v1799
        %vm1808 = vweird.f32 %v1802
        %vm1809 = vmor %vm1807, %vm1808
        %v1810 = vsel %vm1809, %v1802, %v1806
        %v1811 = vand.u32 2147483647, %v1799
        %vm1812 = vcmp.eq.f32.partialorder %v1811, 8.507059e+37
        %v1813 = vand.u32 %v1799, 2147483648
        %v1814 = vor.u32 1.1754944e-38, %v1813
        %v1815 = vsel %vm1812, %v1814, %v1810
        %v1816 = vmul.f32 1.0, %v1815
        %v1817 = vrcp.pop %v1800
        %v1818 = vmul.f32 %v1800, %v1817
        %v1819 = vsub.f32 1.0, %v1818
        %v1820 = vmul.f32 %v1817, %v1819
        %v1821 = vadd.f32 %v1817, %v1820
        %vm1822 = vweird.f32 %v1800
        %vm1823 = vweird.f32 %v1817
        %vm1824 = vmor %vm1822, %vm1823
        %v1825 = vsel %vm1824, %v1817, %v1821
        %v1826 = vand.u32 2147483647, %v1800
        %vm1827 = vcmp.eq.f32.partialorder %v1826, 8.507059e+37
        %v1828 = vand.u32 %v1800, 2147483648
        %v1829 = vor.u32 1.1754944e-38, %v1828
        %v1830 = vsel %vm1827, %v1829, %v1825
        %v1831 = vmul.f32 1.0, %v1830
        %v1832 = vrcp.pop %v1801
        %v1833 = vmul.f32 %v1801, %v1832
        %v1834 = vsub.f32 1.0, %v1833
        %v1835 = vmul.f32 %v1832, %v1834
        %v1836 = vadd.f32 %v1832, %v1835
        %vm1837 = vweird.f32 %v1801
        %vm1838 = vweird.f32 %v1832
        %vm1839 = vmor %vm1837, %vm1838
        %v1840 = vsel %vm1839, %v1832, %v1836
        %v1841 = vand.u32 2147483647, %v1801
        %vm1842 = vcmp.eq.f32.partialorder %v1841, 8.507059e+37
        %v1843 = vand.u32 %v1801, 2147483648
        %v1844 = vor.u32 1.1754944e-38, %v1843
        %v1845 = vsel %vm1842, %v1844, %v1840
        %v1846 = vmul.f32 1.0, %v1845
        %v1847 = vmul.f32 %v1816, 1.0614054
        %v1848 = vmul.f32 %v1831, 1.0614054
        %v1849 = vmul.f32 %v1846, 1.0614054
        %v1850 = vadd.f32 %v1847, -1.4531521
        %v1851 = vadd.f32 %v1848, -1.4531521
        %v1852 = vadd.f32 %v1849, -1.4531521
        %v1853 = vmul.f32 %v1850, %v1816
        %v1854 = vmul.f32 %v1851, %v1831
        %v1855 = vmul.f32 %v1852, %v1846
        %v1856 = vadd.f32 %v1853, 1.4214138
        %v1857 = vadd.f32 %v1854, 1.4214138
        %v1858 = vadd.f32 %v1855, 1.4214138
        %v1859 = vmul.f32 %v1856, %v1816
        %v1860 = vmul.f32 %v1857, %v1831
        %v1861 = vmul.f32 %v1858, %v1846
        %v1862 = vadd.f32 %v1859, -0.28449672
        %v1863 = vadd.f32 %v1860, -0.28449672
        %v1864 = vadd.f32 %v1861, -0.28449672
        %v1865 = vmul.f32 %v1862, %v1816
        %v1866 = vmul.f32 %v1863, %v1831
        %v1867 = vmul.f32 %v1864, %v1846
        %v1868 = vadd.f32 %v1865, 0.2548296
        %v1869 = vadd.f32 %v1866, 0.2548296
        %v1870 = vadd.f32 %v1867, 0.2548296
        %v1871 = vmul.f32 %v1868, %v1816
        %v1872 = vmul.f32 %v1869, %v1831
        %v1873 = vmul.f32 %v1870, %v1846
        %v1874 = vsub.f32 0.0, %v1793
        %v1875 = vsub.f32 0.0, %v1794
        %v1876 = vsub.f32 0.0, %v1795
        %v1877 = vmul.f32 %v1874, %v1793
        %v1878 = vmul.f32 %v1875, %v1794
        %v1879 = vmul.f32 %v1876, %v1795
        %v1880 = vmul.f32 %v1877, 1.442695
        %v1881 = vpow.pop %v1880
        %v1882 = vmul.f32 %v1878, 1.442695
        %v1883 = vpow.pop %v1882
        %v1884 = vmul.f32 %v1879, 1.442695
        %v1885 = vpow.pop %v1884
        %v1886 = vmul.f32 %v1871, %v1881
        %v1887 = vmul.f32 %v1872, %v1883
        %v1888 = vmul.f32 %v1873, %v1885
        %v1889 = vsub.f32 1.0, %v1886
        %v1890 = vsub.f32 1.0, %v1887
        %v1891 = vsub.f32 1.0, %v1888
        %vm1892 = vcmp.ge.f32.partialorder %v1790, 0.0
        %vm1893 = vcmp.ge.f32.partialorder %v1791, 0.0
        %vm1894 = vcmp.ge.f32.partialorder %v1792, 0.0
        %v1895 = vsub.f32 0.0, %v1889
        %v1896 = vsub.f32 0.0, %v1890
        %v1897 = vsub.f32 0.0, %v1891
        %v1898 = vsel %vm1892, %v1889, %v1895
        %v1899 = vsel %vm1893, %v1890, %v1896
        %v1900 = vsel %vm1894, %v1891, %v1897
        %v1901 = vadd.f32 %v1898, 1.0
        %v1902 = vadd.f32 %v1899, 1.0
        %v1903 = vadd.f32 %v1900, 1.0
        %v1904 = vmul.f32 %v1787, %v1901
        %v1905 = vmul.f32 %v1788, %v1902
        %v1906 = vmul.f32 %v1789, %v1903
        %v1907 = vpack.c.bf16 %v1905, %v1904
        %v1908 = vpack.c.bf16 %v1906, %v1906
        %v1909 = vld [vmem:[#allocation10] sm:$0xf]
        %v1910 = vld [vmem:[#allocation10 + $0x4] sm:$0xf]
        %v1911 = vld [vmem:[#allocation10 + $0x8] sm:$0xf]
        %v1912 = vld [vmem:[#allocation10 + $0xc] sm:$0xf]
        %v1913 = vld [vmem:[#allocation10 + $0x10] sm:$0xf]
        %v1914 = vld [vmem:[#allocation10 + $0x14] sm:$0xf]
        %v1915 = vld [vmem:[#allocation10 + $0x18] sm:$0xf]
        %v1916 = vld [vmem:[#allocation10 + $0x1c] sm:$0xf]
        %v1917 = vld [vmem:[#allocation10 + $0x20] sm:$0xf]
        %v1918 = vld [vmem:[#allocation10 + $0x24] sm:$0xf]
        %v1919 = vld [vmem:[#allocation10 + $0x28] sm:$0xf]
        %v1920 = vld [vmem:[#allocation10 + $0x2c] sm:$0xf]
        %v1921 = vld [vmem:[#allocation10 + $0x30] sm:$0xf]
        %v1922 = vld [vmem:[#allocation10 + $0x34] sm:$0xf]
        %v1923 = vld [vmem:[#allocation10 + $0x38] sm:$0xf]
        %v1924 = vld [vmem:[#allocation10 + $0x3c] sm:$0xf]
        %v1925 = vld [vmem:[%s13] sm:$0x1]
        %v1927 = vperm.slane %v1925, 0
        %v1945 = vunpack.c.l.b16 %v1909
        %v1946 = vunpack.c.l.b16 %v1910
        %v1947 = vunpack.c.l.b16 %v1911
        %v1948 = vunpack.c.l.b16 %v1912
        %v1949 = vunpack.c.l.b16 %v1913
        %v1950 = vunpack.c.l.b16 %v1914
        %v1951 = vunpack.c.l.b16 %v1915
        %v1952 = vunpack.c.l.b16 %v1916
        %v1953 = vunpack.c.l.b16 %v1917
        %v1954 = vunpack.c.l.b16 %v1918
        %v1955 = vunpack.c.l.b16 %v1919
        %v1956 = vunpack.c.l.b16 %v1920
        %v1957 = vunpack.c.l.b16 %v1921
        %v1958 = vunpack.c.l.b16 %v1922
        %v1959 = vunpack.c.l.b16 %v1923
        %v1960 = vunpack.c.l.b16 %v1924
        %v1961 = vpack.c.b16 %v1946, %v1945
        %v1962 = vpack.c.b16 %v1948, %v1947
        %v1963 = vpack.c.b16 %v1950, %v1949
        %v1964 = vpack.c.b16 %v1952, %v1951
        %v1965 = vpack.c.b16 %v1954, %v1953
        %v1966 = vpack.c.b16 %v1956, %v1955
        %v1967 = vpack.c.b16 %v1958, %v1957
        %v1968 = vpack.c.b16 %v1960, %v1959
        %1977 = vmatpush.bf16.msra.mxu0 %v1968
        %1978 = vmatpush.bf16.msra.mxu0 %v1967
        %1979 = vmatpush.bf16.msra.mxu0 %v1966
        %1980 = vmatpush.bf16.msra.mxu0 %v1965
        %1981 = vmatpush.bf16.msra.mxu0 %v1964
        %1982 = vmatpush.bf16.msra.mxu0 %v1963
        %1983 = vmatpush.bf16.msra.mxu0 %v1962
        %1984 = vmatpush.bf16.msra.mxu0 %v1961
        %1985 = vmatmul.bf16.gmra.mxu0 %v1907
        %v1986 = vpop.f32.mrf.mxu0
        %v1987 = vadd.f32 %v1927, %v1986
        %v1988 = vpop.f32.mrf.mxu0
        %v1989 = vadd.f32 %v1927, %v1988
        %1990 = vmatmul.bf16.gmra.mxu0 %v1908
        %v1991 = vpop.f32.mrf.mxu0
        %v1992 = vadd.f32 %v1927, %v1991
        %v1993 = vpop.f32.mrf.mxu0
        %1994 = vdwg.mxu0
        %v1995 = vadd.f32 %v1696, %v1987
        %v1996 = vadd.f32 %v1697, %v1989
        %v1997 = vadd.f32 %v1698, %v1992
        %v1998 = vld [vmem:[%s14] sm:$0x1]
        %v1999 = vld [vmem:[%s15] sm:$0x1]
        %2000 = vadd.xlane.f32.xlu0 %v1995
        %v2001 = vpop.xlane.xlu0 %2000
        %2002 = vadd.xlane.f32.xlu0 %v1996
        %v2003 = vpop.xlane.xlu0 %2002
        %2004 = vadd.xlane.f32.xlu0 %v1997
        %v2005 = vpop.xlane.xlu0 %2004
        %v2006 = vmul.f32 %v2001, %v1632
        %v2007 = vmul.f32 %v2003, %v1632
        %v2008 = vmul.f32 %v2005, %v1632
        %v2009 = vsub.f32 %v1995, %v2006
        %v2010 = vsub.f32 %v1996, %v2007
        %v2011 = vsub.f32 %v1997, %v2008
        %v2012 = vmul.f32 %v2009, %v2009
        %v2013 = vmul.f32 %v2010, %v2010
        %v2014 = vmul.f32 %v2011, %v2011
        %2015 = vadd.xlane.f32.xlu0 %v2012
        %v2016 = vpop.xlane.xlu0 %2015
        %2017 = vadd.xlane.f32.xlu0 %v2013
        %v2018 = vpop.xlane.xlu0 %2017
        %2019 = vadd.xlane.f32.xlu0 %v2014
        %v2020 = vpop.xlane.xlu0 %2019
        %v2021 = vmul.f32 %v2016, %v1632
        %v2022 = vmul.f32 %v2018, %v1632
        %v2023 = vmul.f32 %v2020, %v1632
        %v2024 = vadd.f32 %v2021, 1e-05
        %v2025 = vadd.f32 %v2022, 1e-05
        %v2026 = vadd.f32 %v2023, 1e-05
        %v2027 = vrsqrt.pop %v2024
        %v2028 = vmul.f32 %v2027, %v2024
        %v2029 = vmul.f32 %v2028, %v2027
        %v2030 = vmul.f32 0.5, %v2029
        %v2031 = vsub.f32 1.5, %v2030
        %v2032 = vmul.f32 %v2027, %v2031
        %vm2033 = vweird.f32 %v2024
        %vm2034 = vweird.f32 %v2027
        %vm2035 = vmor %vm2033, %vm2034
        %v2036 = vsel %vm2035, %v2027, %v2032
        %v2037 = vrsqrt.pop %v2025
        %v2038 = vmul.f32 %v2037, %v2025
        %v2039 = vmul.f32 %v2038, %v2037
        %v2040 = vmul.f32 0.5, %v2039
        %v2041 = vsub.f32 1.5, %v2040
        %v2042 = vmul.f32 %v2037, %v2041
        %vm2043 = vweird.f32 %v2025
        %vm2044 = vweird.f32 %v2037
        %vm2045 = vmor %vm2043, %vm2044
        %v2046 = vsel %vm2045, %v2037, %v2042
        %v2047 = vrsqrt.pop %v2026
        %v2048 = vmul.f32 %v2047, %v2026
        %v2049 = vmul.f32 %v2048, %v2047
        %v2050 = vmul.f32 0.5, %v2049
        %v2051 = vsub.f32 1.5, %v2050
        %v2052 = vmul.f32 %v2047, %v2051
        %vm2053 = vweird.f32 %v2026
        %vm2054 = vweird.f32 %v2047
        %vm2055 = vmor %vm2053, %vm2054
        %v2056 = vsel %vm2055, %v2047, %v2052
        %v2057 = vmul.f32 %v2009, %v2036
        %v2058 = vmul.f32 %v2010, %v2046
        %v2059 = vmul.f32 %v2011, %v2056
        %v2061 = vperm.slane %v1998, 0
        %v2063 = vmul.f32 %v2057, %v2061
        %v2064 = vmul.f32 %v2058, %v2061
        %v2065 = vmul.f32 %v2059, %v2061
        %v2067 = vperm.slane %v1999, 0
        %v2069 = vadd.f32 %v2063, %v2067
        %v2070 = vadd.f32 %v2064, %v2067
        %v2071 = vadd.f32 %v2065, %v2067
        %2072 = vst [vmem:[%s607] sm:$0xff] %v2069
        %2073 = vst [vmem:[%s607 + $0x8] sm:$0xff] %v2070
        %2074 = vst [vmem:[%s607 + $0x10] sm:$0xff] %v2071
        %s2075 = sand.u32 %s384, 1
        %s2076 = scalar_lea.sflag [#allocation4], %s2075
        %s2077 = sand.u32 %s384, 1
        %s2078 = smul.addr %s2077, 24
        %s2079 = scalar_lea.vmem [#allocation11], %s2078
        // Predicated region
        $region105: #{tpu_custom_call.1} parent=83 // pred_check
          %p2080 = pneg %p394
        $region106: #{tpu_custom_call.1} parent=83 // pred_check_branch
          %2082 = sbr.rel (%p2080) target = $region108
        $region107: #{tpu_custom_call.1} parent=83 // pred_region
          %s2083 = smul.u32 3, %s35
          %2085 = vsyncadd %s2076, 0
          %s2086 = smul.addr %s2083, 8
          %s2087 = scalar_lea.hbm %s16, %s2086
          %s2088 = sshll.u32 %s2079, 4
          %s2089 = int_to_ptr.vmem [resolvable:$true] %s2088
          %s2090 = sshll.u32 %s2087, 4
          %s2091 = int_to_ptr.hbm [resolvable:$true] %s2090
          %2096 = dma.vmem_to_hbm [thread:$0]  %s2089, 384, %s2091, %s2076, 128, 128, 8
        $region108: #{tpu_custom_call.1} parent=83 // pred_fallthru
          _
      $region84: #{tpu_custom_call.1} parent=5 // pred_fallthru
        _
      %p2097 = scmp.le.s32.totalorder 2, %s30
      // Predicated region
      $region109: #{tpu_custom_call.1} parent=5 // pred_check
        %p2098 = pneg %p2097
      $region110: #{tpu_custom_call.1} parent=5 // pred_check_branch
        %2100 = sbr.rel (%p2098) target = $region112
      $region111: #{tpu_custom_call.1} parent=5 // pred_region
        %s2101 = ssub.s32 %s30, 2
        // Predicated region
        $region113: #{tpu_custom_call.1} parent=111 // pred_check
          %p2102 = pneg %p400
        $region114: #{tpu_custom_call.1} parent=111 // pred_check_branch
          %2104 = sbr.rel (%p2102) target = $region116
        $region115: #{tpu_custom_call.1} parent=111 // pred_region
          %s2105 = sand.u32 %s385, 1
          %s2106 = scalar_lea.sflag [#allocation4], %s2105
          %s2107 = sand.u32 %s385, 1
          %s2108 = smul.addr %s2107, 24
          %s2109 = scalar_lea.vmem [#allocation11], %s2108
          %2111 = dma.done %s2106, 384
        $region116: #{tpu_custom_call.1} parent=111 // pred_fallthru
          _
      $region112: #{tpu_custom_call.1} parent=5 // pred_fallthru
        _
    $region6: #{tpu_custom_call.1} parent=1 // loop_footer
      %s34 = sadd.s32 1, %s30
    $region7: #{tpu_custom_call.1} parent=1 // loop_footer_branch
      %29 = sbr.rel target = $region3
    $region8: #{tpu_custom_call.1} parent=1 // loop_exit
      _
    %2112 = vsyncpa [#allocation3], 1
    %s2113 = scalar_lea.sflag [#allocation3], 1
    %2114 = vsyncpa %s2113, 1
    %2115 = vsyncpa [#allocation6], 1
    %2116 = vsyncpa [#allocation9], 1
    %2117 = vsyncpa [#allocation4], 1
    %s2118 = scalar_lea.sflag [#allocation4], 1
    %2119 = vsyncpa %s2118, 1

</llo_original>
